<compile_context>
chip_gen: v7x
topology: tpu7x:2x2x1
jax: 0.10.0
libtpu: 0.0.40
codegen_flags: <defaults>
</compile_context>

<pallas_src>
import functools

import jax
import jax.numpy as jnp
from jax.experimental import pallas as pl
from jax.experimental.pallas import tpu as pltpu


def _round_up(x, m):
    return (x + m - 1) // m * m


def _vmem_capacity_bytes():
    """Per-TensorCore VMEM capacity; conservative fallback if the query fails."""
    try:
        info = pltpu.get_tpu_info()
        cap = int(getattr(info, "vmem_capacity_bytes", 0))
        if cap > 0:
            return cap
    except Exception:
        pass
    return 128 * 1024 * 1024


def _has_bf16_valu():
    """bf16 VALUs exist on v6e / v7x; v5e and older do not."""
    try:
        kind = jax.devices()[0].device_kind.lower()
    except Exception:
        return False
    return ("v6" in kind) or ("v7" in kind)


def _pick_head_tile(S, H3, RT, RTP, *, pair_elem_bytes, out_elem_bytes,
                    budget_bytes):
    """Head-tile TH: divides S, keeps the per-step live set under budget, keeps
    the output block lane-dense ((TH*S) % 128 == 0 or TH == S), and prefers
    sublane-aligned TH (multiple of 8) so the projection-scratch slice needs no
    relayout."""
    def live_bytes(th):
        m = th * S
        pair = m * H3 * pair_elem_bytes        # pair tile (+ bf16 copy on f32 path)
        score = m * RTP * 4 + 2 * m * RT * 4   # matmul result + sliced/biased + transposed
        out = 2 * m * RT * out_elem_bytes      # double-buffered output block
        return pair + score + out

    cands = [th for th in range(1, S + 1)
             if S % th == 0 and ((th * S) % 128 == 0 or th == S)]
    aligned = [th for th in cands if th % 8 == 0 or th == S]
    for pool in (aligned, cands):
        fitting = [th for th in pool if live_bytes(th) <= budget_bytes]
        if fitting:
            return max(fitting)
    # Nothing fits the budget (awkward S): take the smallest live set that is
    # still expressible rather than blindly falling back to TH == S.
    return min(cands, key=live_bytes)


def _onerel_kernel(x_ref, w1h_ref, w1t_ref, b1_ref, w2_ref, b2_ref,
                   o_ref, hb_sc, tp_sc, *, head_tile, rt):
    """One grid step = one (batch, head-tile) pair.

    entity_pair = ReLU(concat([head, tail]) @ W1 + b1)
                = ReLU((head @ W1h + b1) + tail @ W1t)
    score       = entity_pair @ W2 + b2       (stored transposed / tag-major)
    """
    S, H3 = tp_sc.shape
    h = pl.program_id(1)

    # Per-sequence projections: computed once (h == 0), reused for all head
    # tiles of this batch element (head-tile grid axis is "arbitrary").
    @pl.when(h == 0)
    def _():
        x = x_ref[0]                                              # (S, D) bf16
        hb = jnp.dot(x, w1h_ref[...], preferred_element_type=jnp.float32)
        hb_sc[...] = (hb + b1_ref[...]).astype(hb_sc.dtype)       # fold b1 once
        tp = jnp.dot(x, w1t_ref[...], preferred_element_type=jnp.float32)
        tp_sc[...] = tp.astype(tp_sc.dtype)

    start = pl.multiple_of(h * head_tile, head_tile)
    hb_tile = hb_sc[pl.ds(start, head_tile), :]                   # (TH, H3)

    # pair[i, j, :] = ReLU(hb[i] + t[j]); only a (TH, S, H3) tile is ever live.
    # On v6e/v7x the scratch is bf16, so this whole pass runs on bf16 VALUs.
    pair = jnp.maximum(hb_tile[:, None, :] + tp_sc[...][None, :, :], 0.0)
    pair = pair.reshape(head_tile * S, H3).astype(jnp.bfloat16)

    score = jnp.dot(pair, w2_ref[...],
                    preferred_element_type=jnp.float32)           # (TH*S, RTP)
    # Drop padded relation columns *before* the bias add and the transpose so
    # the XLU/VPU never touch them; the store stays lane-dense (last dim TH*S).
    score = score[:, :rt] + b2_ref[...]
    o_ref[0] = score.T.astype(o_ref.dtype)                        # (RT, TH*S)


def onerel_triple_score(encoded, w1, b1, w2, b2, num_rel, tag_size,
                        train=True, head_tile=None, score_dtype=jnp.float32):
    """encoded: (B, S, D) float32.
       w1: (2D, 3D)  project_matrix weight (input-major),  b1: (3D,)
       w2: (3D, R*T) relation_linear weight (input-major), b2: (R*T,)
    """
    B, S, D = encoded.shape
    H3 = w1.shape[1]
    RT = w2.shape[1]
    assert w1.shape[0] == 2 * D and RT == num_rel * tag_size

    RTP = _round_up(RT, 128)   # lane-aligned relation width for the MXU

    # Generation-aware choices.
    proj_dtype = jnp.bfloat16 if _has_bf16_valu() else jnp.float32
    proj_bytes = jnp.dtype(proj_dtype).itemsize
    pair_elem_bytes = 2 if proj_dtype == jnp.bfloat16 else 6   # f32 pair + bf16 copy
    out_bytes = jnp.dtype(score_dtype).itemsize

    vmem_cap = _vmem_capacity_bytes()
    vmem_limit = min(48 * 1024 * 1024, int(0.65 * vmem_cap))
    fixed_bytes = (2 * D * H3 * 2               # W1h + W1t (bf16, single-buffered)
                   + H3 * RTP * 2               # W2 (bf16, single-buffered)
                   + 2 * S * H3 * proj_bytes    # projection scratch (hb, tp)
                   + 2 * S * D * 2              # x block, double-buffered
                   + (H3 + RT) * 4)             # biases
    pair_budget = max(vmem_limit - fixed_bytes - (4 << 20), 2 << 20)

    if head_tile is None:
        TH = _pick_head_tile(S, H3, RT, RTP, pair_elem_bytes=pair_elem_bytes,
                             out_elem_bytes=out_bytes, budget_bytes=pair_budget)
    else:
        TH = head_tile
    assert S % TH == 0 and ((TH * S) % 128 == 0 or TH == S)
    n_head_tiles = S // TH

    # Split project_matrix: concat([h, t]) @ W1 == h @ W1h + t @ W1t.
    w1h = w1[:D].astype(jnp.bfloat16)
    w1t = w1[D:].astype(jnp.bfloat16)
    b1_2d = b1.reshape(1, H3).astype(jnp.float32)

    # Reorder relation columns (rel, tag) -> (tag, rel) so the kernel's
    # transposed store lands directly in the final (B, tag, rel, S, S) layout.
    # Only W2 is zero-padded to RTP; the bias stays unpadded (added post-slice).
    w2_tm = w2.reshape(H3, num_rel, tag_size).transpose(0, 2, 1).reshape(H3, RT)
    b2_tm = b2.reshape(num_rel, tag_size).transpose(1, 0).reshape(1, RT)
    w2p = jnp.pad(w2_tm, ((0, 0), (0, RTP - RT))).astype(jnp.bfloat16)
    b2_tm = b2_tm.astype(jnp.float32)

    x_bf16 = encoded.astype(jnp.bfloat16)

    kernel = functools.partial(_onerel_kernel, head_tile=TH, rt=RT)

    def build(single_buffer_weights):
        wkw = ({"pipeline_mode": pl.Buffered(1)} if single_buffer_weights else {})
        return pl.pallas_call(
            kernel,
            out_shape=jax.ShapeDtypeStruct((B, RT, S * S), score_dtype),
            grid_spec=pltpu.PrefetchScalarGridSpec(
                num_scalar_prefetch=0,
                grid=(B, n_head_tiles),
                in_specs=[
                    pl.BlockSpec((1, S, D), lambda b, h: (b, 0, 0)),
                    pl.BlockSpec((D, H3), lambda b, h: (0, 0), **wkw),
                    pl.BlockSpec((D, H3), lambda b, h: (0, 0), **wkw),
                    pl.BlockSpec((1, H3), lambda b, h: (0, 0), **wkw),
                    pl.BlockSpec((H3, RTP), lambda b, h: (0, 0), **wkw),
                    pl.BlockSpec((1, RT), lambda b, h: (0, 0), **wkw),
                ],
                out_specs=pl.BlockSpec((1, RT, TH * S), lambda b, h: (b, 0, h)),
                scratch_shapes=[
                    pltpu.VMEM((S, H3), proj_dtype),   # head projection (+ b1)
                    pltpu.VMEM((S, H3), proj_dtype),   # tail projection
                ],
            ),
            compiler_params=pltpu.CompilerParams(
                # batch axis parallel (megacore); head-tile axis sequential
                # because the projection scratch is carried across head tiles.
                # TODO(synk): for v7x at B<=2, hoist the projections out of the
                # kernel so both grid axes can be "parallel".
                dimension_semantics=("parallel", "arbitrary"),
                vmem_limit_bytes=vmem_limit,
            ),
        )

    try:
        out = build(True)(x_bf16, w1h, w1t, b1_2d, w2p, b2_tm)
    except Exception:
        # Fallback for environments where BlockSpec(pipeline_mode=...) is
        # unavailable: identical kernel with default double-buffering.
        out = build(False)(x_bf16, w1h, w1t, b1_2d, w2p, b2_tm)

    # (B, T*R, S*S) with tag-major channels: the reference permute(0,4,3,1,2)
    # is now a pure reshape.
    matrix_score = out.reshape(B, tag_size, num_rel, S, S)
    if train:
        return matrix_score
    # TODO(synk): fuse this tag-axis argmax into the kernel (int32/int8 output)
    # to cut eval-path HBM writes by tag_size x.
    return jnp.argmax(matrix_score, axis=1)            # (B, num_rel, S, S)


def onerel_forward(input_ids, attention_mask, params, config, train=True):
    # --- "BERT" encoder stand-in: deterministic embedding lookup, masked ---
    # TODO(synk): full transformer encoder not implemented.
    encoded = params["embedding"][input_ids]                     # (B, S, D)
    encoded = encoded * attention_mask[..., None].astype(encoded.dtype)
    # dropout (p=0.2 / p=0.1) -> identity in eval mode
    return onerel_triple_score(
        encoded,
        params["w1"], params["b1"], params["w2"], params["b2"],
        config["num_rel"], config["tag_size"], train=train,
        head_tile=config.get("head_tile"))


def _reference(encoded, params, config, train=True):
    B, S, D = encoded.shape
    head_rep = jnp.broadcast_to(encoded[:, :, None, :],
                                (B, S, S, D)).reshape(B, S * S, D)
    tail_rep = jnp.tile(encoded, (1, S, 1))
    pair = jnp.concatenate([head_rep, tail_rep], axis=-1)
    pair = pair @ params["w1"] + params["b1"]
    pair = jnp.maximum(pair, 0.0)
    score = pair @ params["w2"] + params["b2"]
    score = score.reshape(B, S, S, config["num_rel"], config["tag_size"])
    if train:
        return jnp.transpose(score, (0, 4, 3, 1, 2))
    return jnp.transpose(jnp.argmax(score, axis=-1), (0, 3, 1, 2))


if __name__ == "__main__":
    config = dict(bert_dim=64, num_rel=4, tag_size=4, vocab=64, head_tile=8)
    B, S, D = 2, 16, config["bert_dim"]
    RT = config["num_rel"] * config["tag_size"]

    key = jax.random.PRNGKey(0)
    k_emb, k_w1, k_b1, k_w2, k_b2, k_ids = jax.random.split(key, 6)

    params = {
        "embedding": jax.random.normal(k_emb, (config["vocab"], D), jnp.float32) * 0.1,
        # project_matrix: Linear(2D -> 3D), stored input-major (in, out)
        "w1": jax.random.normal(k_w1, (2 * D, 3 * D), jnp.float32) * 0.05,
        "b1": jax.random.normal(k_b1, (3 * D,), jnp.float32) * 0.05,
        # relation_linear: Linear(3D -> num_rel * tag_size)
        "w2": jax.random.normal(k_w2, (3 * D, RT), jnp.float32) * 0.05,
        "b2": jax.random.normal(k_b2, (RT,), jnp.float32) * 0.05,
    }

    input_ids = jax.random.randint(k_ids, (B, S), 0, config["vocab"], jnp.int32)
    attention_mask = jnp.ones((B, S), jnp.int32)

    out = onerel_forward(input_ids, attention_mask, params, config, train=True)
    out = jax.block_until_ready(out)
    assert out.shape == (B, config["tag_size"], config["num_rel"], S, S), out.shape

    # correctness check against a pure-JAX f32 reference (kernel uses bf16 matmuls)
    encoded = params["embedding"][input_ids] * attention_mask[..., None].astype(jnp.float32)
    ref = _reference(encoded, params, config, train=True)
    assert jnp.allclose(out, ref, atol=2e-2, rtol=2e-2), float(
        jnp.max(jnp.abs(out - ref)))

    print("KERNEL_OK")
</pallas_src>

<mosaic_0001>
module attributes {stable_mosaic.version = 11 : i64} {
  func.func @_onerel_kernel(%arg0: i32, %arg1: i32, %arg2: memref<1x16x64xbf16, #tpu.memory_space<vmem>>, %arg3: memref<64x192xbf16, #tpu.memory_space<vmem>>, %arg4: memref<64x192xbf16, #tpu.memory_space<vmem>>, %arg5: memref<1x192xf32, #tpu.memory_space<vmem>>, %arg6: memref<192x128xbf16, #tpu.memory_space<vmem>>, %arg7: memref<1x16xf32, #tpu.memory_space<vmem>>, %arg8: memref<1x16x128xf32, #tpu.memory_space<vmem>>, %arg9: memref<16x192xf32, #tpu.memory_space<vmem>>, %arg10: memref<16x192xf32, #tpu.memory_space<vmem>>) attributes {dimension_semantics = [#tpu.dimension_semantics<parallel>, #tpu.dimension_semantics<arbitrary>], iteration_bounds = array<i64: 2, 2>, scalar_prefetch = 0 : i64, scratch_operands = 2 : i64, tpu.core_type = #tpu.core_type<tc>, window_params = [{transform_indices = @transform_0, window_bounds = array<i64: 1, 16, 64>}, {pipeline_mode = #tpu.pipeline_mode<synchronous>, transform_indices = @transform_1, window_bounds = array<i64: 64, 192>}, {pipeline_mode = #tpu.pipeline_mode<synchronous>, transform_indices = @transform_2, window_bounds = array<i64: 64, 192>}, {pipeline_mode = #tpu.pipeline_mode<synchronous>, transform_indices = @transform_3, window_bounds = array<i64: 1, 192>}, {pipeline_mode = #tpu.pipeline_mode<synchronous>, transform_indices = @transform_4, window_bounds = array<i64: 192, 128>}, {pipeline_mode = #tpu.pipeline_mode<synchronous>, transform_indices = @transform_5, window_bounds = array<i64: 1, 16>}, {transform_indices = @transform_6, window_bounds = array<i64: 1, 16, 128>}]} {
    %c0_i32 = arith.constant 0 : i32
    %0 = arith.cmpi eq, %arg1, %c0_i32 : i32
    %1 = arith.extui %0 : i1 to i32
    %c0_i32_0 = arith.constant 0 : i32
    %2 = arith.cmpi ne, %1, %c0_i32_0 : i32
    scf.if %2 {
      %c0_11 = arith.constant 0 : index
      %c0_12 = arith.constant 0 : index
      %c0_13 = arith.constant 0 : index
      %27 = vector.load %arg2[%c0_11, %c0_12, %c0_13] : memref<1x16x64xbf16, #tpu.memory_space<vmem>>, vector<1x16x64xbf16>
      %28 = vector.shape_cast %27 : vector<1x16x64xbf16> to vector<16x64xbf16>
      %c0_14 = arith.constant 0 : index
      %c0_15 = arith.constant 0 : index
      %29 = vector.load %arg3[%c0_14, %c0_15] : memref<64x192xbf16, #tpu.memory_space<vmem>>, vector<64x192xbf16>
      %cst_16 = arith.constant dense<0.000000e+00> : vector<16x192xf32>
      %30 = tpu.matmul %28, %29, %cst_16 {dimension_numbers = #tpu.dot_dimension_numbers<[1], [0], [0], [1], [0, 0, 1, 1], [], []>} : vector<16x64xbf16>, vector<64x192xbf16>, vector<16x192xf32> -> vector<16x192xf32>
      %c0_17 = arith.constant 0 : index
      %c0_18 = arith.constant 0 : index
      %31 = vector.load %arg5[%c0_17, %c0_18] : memref<1x192xf32, #tpu.memory_space<vmem>>, vector<1x192xf32>
      %32 = vector.broadcast %31 : vector<1x192xf32> to vector<16x192xf32>
      %33 = arith.addf %30, %32 : vector<16x192xf32>
      %c0_19 = arith.constant 0 : index
      %c0_20 = arith.constant 0 : index
      %34 = vector.load %arg9[%c0_19, %c0_20] : memref<16x192xf32, #tpu.memory_space<vmem>>, vector<16x192xf32>
      tpu.vector_store %arg9[%c0_19, %c0_20], %33 {strides = array<i32>} : memref<16x192xf32, #tpu.memory_space<vmem>>, vector<16x192xf32>,
      %c0_21 = arith.constant 0 : index
      %c0_22 = arith.constant 0 : index
      %35 = vector.load %arg4[%c0_21, %c0_22] : memref<64x192xbf16, #tpu.memory_space<vmem>>, vector<64x192xbf16>
      %cst_23 = arith.constant dense<0.000000e+00> : vector<16x192xf32>
      %36 = tpu.matmul %28, %35, %cst_23 {dimension_numbers = #tpu.dot_dimension_numbers<[1], [0], [0], [1], [0, 0, 1, 1], [], []>} : vector<16x64xbf16>, vector<64x192xbf16>, vector<16x192xf32> -> vector<16x192xf32>
      %c0_24 = arith.constant 0 : index
      %c0_25 = arith.constant 0 : index
      %37 = vector.load %arg10[%c0_24, %c0_25] : memref<16x192xf32, #tpu.memory_space<vmem>>, vector<16x192xf32>
      tpu.vector_store %arg10[%c0_24, %c0_25], %36 {strides = array<i32>} : memref<16x192xf32, #tpu.memory_space<vmem>>, vector<16x192xf32>,
    } else {
    }
    %c8_i32 = arith.constant 8 : i32
    %3 = arith.muli %arg1, %c8_i32 : i32
    %4 = tpu.assume_multiple %3, 8 : i32
    %5 = arith.index_cast %4 : i32 to index
    %c0 = arith.constant 0 : index
    %6 = vector.load %arg9[%5, %c0] : memref<16x192xf32, #tpu.memory_space<vmem>>, vector<8x192xf32>
    %7 = vector.shape_cast %6 : vector<8x192xf32> to vector<8x1x192xf32>
    %c0_1 = arith.constant 0 : index
    %c0_2 = arith.constant 0 : index
    %8 = vector.load %arg10[%c0_1, %c0_2] : memref<16x192xf32, #tpu.memory_space<vmem>>, vector<16x192xf32>
    %9 = vector.shape_cast %8 : vector<16x192xf32> to vector<1x16x192xf32>
    %10 = vector.broadcast %7 : vector<8x1x192xf32> to vector<8x16x192xf32>
    %11 = vector.broadcast %9 : vector<1x16x192xf32> to vector<8x16x192xf32>
    %12 = arith.addf %10, %11 : vector<8x16x192xf32>
    %cst = arith.constant 0.000000e+00 : f32
    %13 = vector.broadcast %cst : f32 to vector<8x16x192xf32>
    %14 = arith.maximumf %12, %13 : vector<8x16x192xf32>
    %15 = vector.shape_cast %14 : vector<8x16x192xf32> to vector<128x192xf32>
    %16 = arith.truncf %15 : vector<128x192xf32> to vector<128x192xbf16>
    %c0_3 = arith.constant 0 : index
    %c0_4 = arith.constant 0 : index
    %17 = vector.load %arg6[%c0_3, %c0_4] : memref<192x128xbf16, #tpu.memory_space<vmem>>, vector<192x128xbf16>
    %cst_5 = arith.constant dense<0.000000e+00> : vector<128x128xf32>
    %18 = tpu.matmul %16, %17, %cst_5 {dimension_numbers = #tpu.dot_dimension_numbers<[1], [0], [0], [1], [0, 0, 1, 1], [], []>} : vector<128x192xbf16>, vector<192x128xbf16>, vector<128x128xf32> -> vector<128x128xf32>
    %19 = vector.extract_strided_slice %18 {offsets = [0, 0], sizes = [128, 16], strides = [1, 1]} : vector<128x128xf32> to vector<128x16xf32>
    %c0_6 = arith.constant 0 : index
    %c0_7 = arith.constant 0 : index
    %20 = vector.load %arg7[%c0_6, %c0_7] : memref<1x16xf32, #tpu.memory_space<vmem>>, vector<1x16xf32>
    %21 = vector.broadcast %20 : vector<1x16xf32> to vector<128x16xf32>
    %22 = arith.addf %19, %21 : vector<128x16xf32>
    %23 = tpu.transpose %22, [1, 0] : vector<128x16xf32> -> vector<16x128xf32>
    %c0_8 = arith.constant 0 : index
    %c0_9 = arith.constant 0 : index
    %c0_10 = arith.constant 0 : index
    %24 = vector.load %arg8[%c0_8, %c0_9, %c0_10] : memref<1x16x128xf32, #tpu.memory_space<vmem>>, vector<1x16x128xf32>
    %25 = vector.shape_cast %24 : vector<1x16x128xf32> to vector<16x128xf32>
    %26 = vector.shape_cast %23 : vector<16x128xf32> to vector<1x16x128xf32>
    tpu.vector_store %arg8[%c0_8, %c0_9, %c0_10], %26 {strides = array<i32>} : memref<1x16x128xf32, #tpu.memory_space<vmem>>, vector<1x16x128xf32>,
    return
  }
  func.func @transform_0(%arg0: i32, %arg1: i32) -> (i32, i32, i32) {
    %c0_i32 = arith.constant 0 : i32
    %c0_i32_0 = arith.constant 0 : i32
    %c0_i32_1 = arith.constant 0 : i32
    return %arg0, %c0_i32, %c0_i32_0 : i32, i32, i32
  }
  func.func @transform_1(%arg0: i32, %arg1: i32) -> (i32, i32) {
    %c0_i32 = arith.constant 0 : i32
    %c0_i32_0 = arith.constant 0 : i32
    %c0_i32_1 = arith.constant 0 : i32
    return %c0_i32, %c0_i32_0 : i32, i32
  }
  func.func @transform_2(%arg0: i32, %arg1: i32) -> (i32, i32) {
    %c0_i32 = arith.constant 0 : i32
    %c0_i32_0 = arith.constant 0 : i32
    %c0_i32_1 = arith.constant 0 : i32
    return %c0_i32, %c0_i32_0 : i32, i32
  }
  func.func @transform_3(%arg0: i32, %arg1: i32) -> (i32, i32) {
    %c0_i32 = arith.constant 0 : i32
    %c0_i32_0 = arith.constant 0 : i32
    %c0_i32_1 = arith.constant 0 : i32
    return %c0_i32, %c0_i32_0 : i32, i32
  }
  func.func @transform_4(%arg0: i32, %arg1: i32) -> (i32, i32) {
    %c0_i32 = arith.constant 0 : i32
    %c0_i32_0 = arith.constant 0 : i32
    %c0_i32_1 = arith.constant 0 : i32
    return %c0_i32, %c0_i32_0 : i32, i32
  }
  func.func @transform_5(%arg0: i32, %arg1: i32) -> (i32, i32) {
    %c0_i32 = arith.constant 0 : i32
    %c0_i32_0 = arith.constant 0 : i32
    %c0_i32_1 = arith.constant 0 : i32
    return %c0_i32, %c0_i32_0 : i32, i32
  }
  func.func @transform_6(%arg0: i32, %arg1: i32) -> (i32, i32, i32) {
    %c0_i32 = arith.constant 0 : i32
    %c0_i32_0 = arith.constant 0 : i32
    return %arg0, %c0_i32, %arg1 : i32, i32, i32
  }
}

module attributes {stable_mosaic.version = 11 : i64} {
  func.func @_onerel_kernel(%arg0: i32, %arg1: i32, %arg2: memref<1x16x64xbf16, #tpu.memory_space<vmem>>, %arg3: memref<64x192xbf16, #tpu.memory_space<vmem>>, %arg4: memref<64x192xbf16, #tpu.memory_space<vmem>>, %arg5: memref<1x192xf32, #tpu.memory_space<vmem>>, %arg6: memref<192x128xbf16, #tpu.memory_space<vmem>>, %arg7: memref<1x16xf32, #tpu.memory_space<vmem>>, %arg8: memref<1x16x128xf32, #tpu.memory_space<vmem>>, %arg9: memref<16x192xf32, #tpu.memory_space<vmem>>, %arg10: memref<16x192xf32, #tpu.memory_space<vmem>>) attributes {dimension_semantics = [#tpu.dimension_semantics<parallel>, #tpu.dimension_semantics<arbitrary>], iteration_bounds = array<i64: 2, 2>, scalar_prefetch = 0 : i64, scratch_operands = 2 : i64, tpu.core_type = #tpu.core_type<tc>, window_params = [{transform_indices = @transform_0, window_bounds = array<i64: 1, 16, 64>}, {pipeline_mode = #tpu.pipeline_mode<synchronous>, transform_indices = @transform_1, window_bounds = array<i64: 64, 192>}, {pipeline_mode = #tpu.pipeline_mode<synchronous>, transform_indices = @transform_2, window_bounds = array<i64: 64, 192>}, {pipeline_mode = #tpu.pipeline_mode<synchronous>, transform_indices = @transform_3, window_bounds = array<i64: 1, 192>}, {pipeline_mode = #tpu.pipeline_mode<synchronous>, transform_indices = @transform_4, window_bounds = array<i64: 192, 128>}, {pipeline_mode = #tpu.pipeline_mode<synchronous>, transform_indices = @transform_5, window_bounds = array<i64: 1, 16>}, {transform_indices = @transform_6, window_bounds = array<i64: 1, 16, 128>}]} {
    %c0_i32 = arith.constant 0 : i32
    %0 = arith.cmpi eq, %arg1, %c0_i32 : i32
    %1 = arith.extui %0 : i1 to i32
    %c0_i32_0 = arith.constant 0 : i32
    %2 = arith.cmpi ne, %1, %c0_i32_0 : i32
    scf.if %2 {
      %c0_11 = arith.constant 0 : index
      %c0_12 = arith.constant 0 : index
      %c0_13 = arith.constant 0 : index
      %27 = vector.load %arg2[%c0_11, %c0_12, %c0_13] : memref<1x16x64xbf16, #tpu.memory_space<vmem>>, vector<1x16x64xbf16>
      %28 = vector.shape_cast %27 : vector<1x16x64xbf16> to vector<16x64xbf16>
      %c0_14 = arith.constant 0 : index
      %c0_15 = arith.constant 0 : index
      %29 = vector.load %arg3[%c0_14, %c0_15] : memref<64x192xbf16, #tpu.memory_space<vmem>>, vector<64x192xbf16>
      %cst_16 = arith.constant dense<0.000000e+00> : vector<16x192xf32>
      %30 = tpu.matmul %28, %29, %cst_16 {dimension_numbers = #tpu.dot_dimension_numbers<[1], [0], [0], [1], [0, 0, 1, 1], [], []>} : vector<16x64xbf16>, vector<64x192xbf16>, vector<16x192xf32> -> vector<16x192xf32>
      %c0_17 = arith.constant 0 : index
      %c0_18 = arith.constant 0 : index
      %31 = vector.load %arg5[%c0_17, %c0_18] : memref<1x192xf32, #tpu.memory_space<vmem>>, vector<1x192xf32>
      %32 = vector.broadcast %31 : vector<1x192xf32> to vector<16x192xf32>
      %33 = arith.addf %30, %32 : vector<16x192xf32>
      %c0_19 = arith.constant 0 : index
      %c0_20 = arith.constant 0 : index
      %34 = vector.load %arg9[%c0_19, %c0_20] : memref<16x192xf32, #tpu.memory_space<vmem>>, vector<16x192xf32>
      tpu.vector_store %arg9[%c0_19, %c0_20], %33 {strides = array<i32>} : memref<16x192xf32, #tpu.memory_space<vmem>>, vector<16x192xf32>,
      %c0_21 = arith.constant 0 : index
      %c0_22 = arith.constant 0 : index
      %35 = vector.load %arg4[%c0_21, %c0_22] : memref<64x192xbf16, #tpu.memory_space<vmem>>, vector<64x192xbf16>
      %cst_23 = arith.constant dense<0.000000e+00> : vector<16x192xf32>
      %36 = tpu.matmul %28, %35, %cst_23 {dimension_numbers = #tpu.dot_dimension_numbers<[1], [0], [0], [1], [0, 0, 1, 1], [], []>} : vector<16x64xbf16>, vector<64x192xbf16>, vector<16x192xf32> -> vector<16x192xf32>
      %c0_24 = arith.constant 0 : index
      %c0_25 = arith.constant 0 : index
      %37 = vector.load %arg10[%c0_24, %c0_25] : memref<16x192xf32, #tpu.memory_space<vmem>>, vector<16x192xf32>
      tpu.vector_store %arg10[%c0_24, %c0_25], %36 {strides = array<i32>} : memref<16x192xf32, #tpu.memory_space<vmem>>, vector<16x192xf32>,
    } else {
    }
    %c8_i32 = arith.constant 8 : i32
    %3 = arith.muli %arg1, %c8_i32 : i32
    %4 = tpu.assume_multiple %3, 8 : i32
    %5 = arith.index_cast %4 : i32 to index
    %c0 = arith.constant 0 : index
    %6 = vector.load %arg9[%5, %c0] : memref<16x192xf32, #tpu.memory_space<vmem>>, vector<8x192xf32>
    %7 = vector.shape_cast %6 : vector<8x192xf32> to vector<8x1x192xf32>
    %c0_1 = arith.constant 0 : index
    %c0_2 = arith.constant 0 : index
    %8 = vector.load %arg10[%c0_1, %c0_2] : memref<16x192xf32, #tpu.memory_space<vmem>>, vector<16x192xf32>
    %9 = vector.shape_cast %8 : vector<16x192xf32> to vector<1x16x192xf32>
    %10 = vector.broadcast %7 : vector<8x1x192xf32> to vector<8x16x192xf32>
    %11 = vector.broadcast %9 : vector<1x16x192xf32> to vector<8x16x192xf32>
    %12 = arith.addf %10, %11 : vector<8x16x192xf32>
    %cst = arith.constant 0.000000e+00 : f32
    %13 = vector.broadcast %cst : f32 to vector<8x16x192xf32>
    %14 = arith.maximumf %12, %13 : vector<8x16x192xf32>
    %15 = vector.shape_cast %14 : vector<8x16x192xf32> to vector<128x192xf32>
    %16 = arith.truncf %15 : vector<128x192xf32> to vector<128x192xbf16>
    %c0_3 = arith.constant 0 : index
    %c0_4 = arith.constant 0 : index
    %17 = vector.load %arg6[%c0_3, %c0_4] : memref<192x128xbf16, #tpu.memory_space<vmem>>, vector<192x128xbf16>
    %cst_5 = arith.constant dense<0.000000e+00> : vector<128x128xf32>
    %18 = tpu.matmul %16, %17, %cst_5 {dimension_numbers = #tpu.dot_dimension_numbers<[1], [0], [0], [1], [0, 0, 1, 1], [], []>} : vector<128x192xbf16>, vector<192x128xbf16>, vector<128x128xf32> -> vector<128x128xf32>
    %19 = vector.extract_strided_slice %18 {offsets = [0, 0], sizes = [128, 16], strides = [1, 1]} : vector<128x128xf32> to vector<128x16xf32>
    %c0_6 = arith.constant 0 : index
    %c0_7 = arith.constant 0 : index
    %20 = vector.load %arg7[%c0_6, %c0_7] : memref<1x16xf32, #tpu.memory_space<vmem>>, vector<1x16xf32>
    %21 = vector.broadcast %20 : vector<1x16xf32> to vector<128x16xf32>
    %22 = arith.addf %19, %21 : vector<128x16xf32>
    %23 = tpu.transpose %22, [1, 0] : vector<128x16xf32> -> vector<16x128xf32>
    %c0_8 = arith.constant 0 : index
    %c0_9 = arith.constant 0 : index
    %c0_10 = arith.constant 0 : index
    %24 = vector.load %arg8[%c0_8, %c0_9, %c0_10] : memref<1x16x128xf32, #tpu.memory_space<vmem>>, vector<1x16x128xf32>
    %25 = vector.shape_cast %24 : vector<1x16x128xf32> to vector<16x128xf32>
    %26 = vector.shape_cast %23 : vector<16x128xf32> to vector<1x16x128xf32>
    tpu.vector_store %arg8[%c0_8, %c0_9, %c0_10], %26 {strides = array<i32>} : memref<1x16x128xf32, #tpu.memory_space<vmem>>, vector<1x16x128xf32>,
    return
  }
  func.func @transform_0(%arg0: i32, %arg1: i32) -> (i32, i32, i32) {
    %c0_i32 = arith.constant 0 : i32
    %c0_i32_0 = arith.constant 0 : i32
    %c0_i32_1 = arith.constant 0 : i32
    return %arg0, %c0_i32, %c0_i32_0 : i32, i32, i32
  }
  func.func @transform_1(%arg0: i32, %arg1: i32) -> (i32, i32) {
    %c0_i32 = arith.constant 0 : i32
    %c0_i32_0 = arith.constant 0 : i32
    %c0_i32_1 = arith.constant 0 : i32
    return %c0_i32, %c0_i32_0 : i32, i32
  }
  func.func @transform_2(%arg0: i32, %arg1: i32) -> (i32, i32) {
    %c0_i32 = arith.constant 0 : i32
    %c0_i32_0 = arith.constant 0 : i32
    %c0_i32_1 = arith.constant 0 : i32
    return %c0_i32, %c0_i32_0 : i32, i32
  }
  func.func @transform_3(%arg0: i32, %arg1: i32) -> (i32, i32) {
    %c0_i32 = arith.constant 0 : i32
    %c0_i32_0 = arith.constant 0 : i32
    %c0_i32_1 = arith.constant 0 : i32
    return %c0_i32, %c0_i32_0 : i32, i32
  }
  func.func @transform_4(%arg0: i32, %arg1: i32) -> (i32, i32) {
    %c0_i32 = arith.constant 0 : i32
    %c0_i32_0 = arith.constant 0 : i32
    %c0_i32_1 = arith.constant 0 : i32
    return %c0_i32, %c0_i32_0 : i32, i32
  }
  func.func @transform_5(%arg0: i32, %arg1: i32) -> (i32, i32) {
    %c0_i32 = arith.constant 0 : i32
    %c0_i32_0 = arith.constant 0 : i32
    %c0_i32_1 = arith.constant 0 : i32
    return %c0_i32, %c0_i32_0 : i32, i32
  }
  func.func @transform_6(%arg0: i32, %arg1: i32) -> (i32, i32, i32) {
    %c0_i32 = arith.constant 0 : i32
    %c0_i32_0 = arith.constant 0 : i32
    return %arg0, %c0_i32, %arg1 : i32, i32, i32
  }
}

</mosaic_0001>

<llo_original>
// kernel: tpu_custom_call.1
$region0: #{tpu_custom_call.1}
  #allocation0 [shape = 'u32[]', space=smem, size = 0x4, offset = 0x4, fixed_abs, tag = 'smem constant byte address 0x4 - core index']
  #allocation1 [shape = 'u32[144,128]{1,0:T(1,128)}', space=vmem, size = 0x12000, scoped, tag = 'internal scratch']
  #allocation2 [shape = 'f32[16,192]{1,0:T(8,128)}', space=vmem, size = 0x4000, scoped, tag = 'scratch operand']
  #allocation3 [shape = 'f32[16,192]{1,0:T(8,128)}', space=vmem, size = 0x4000, scoped, tag = 'scratch operand']
  %s0 = inlined_call_operand.hbm [shape: bf16[2,16,64], index: 0, kind: input, shape index: {}]
  %s1 = inlined_call_operand.hbm [shape: bf16[64,192], index: 1, kind: input, shape index: {}]
  %s2 = inlined_call_operand.hbm [shape: bf16[64,192], index: 2, kind: input, shape index: {}]
  %s3 = inlined_call_operand.vmem [shape: f32[1,192], index: 3, kind: input, shape index: {}]
  %s4 = inlined_call_operand.hbm [shape: bf16[192,128], index: 4, kind: input, shape index: {}]
  %s5 = inlined_call_operand.vmem [shape: f32[1,16], index: 5, kind: input, shape index: {}]
  %s6 = inlined_call_operand.hbm [shape: f32[2,16,256], index: 6, kind: output, shape index: {}]
  %s7 = sld [smem:[#allocation0]]
  $region77: #{tpu_custom_call.1} parent=0
    _
  %s9 = ssub.s32 1, %s7
  %s10 = scalar_select 0, %s9, %s7
  $region1: #{tpu_custom_call.1} parent=0
    #allocation4 [shape = 'u8[8192]{0}', space=vmem, size = 0x2000, scoped, tag = 'input window, operand 0']
    #allocation5 [shape = 's32[2]{0}', space=sflag, size = 0x8, scoped, tag = 'scoped memory for tpu_custom_call.1']
    #allocation6 [shape = 's32[2]{0}', space=sflag, size = 0x8, scoped, tag = 'scoped memory for tpu_custom_call.1']
    #allocation7 [shape = 'u8[32768]{0}', space=vmem, size = 0x8000, scoped, tag = 'input window, operand 1, single buffered']
    #allocation8 [shape = 's32[1]{0}', space=sflag, size = 0x4, scoped, tag = 'scoped memory for tpu_custom_call.1']
    #allocation9 [shape = 'u8[32768]{0}', space=vmem, size = 0x8000, scoped, tag = 'input window, operand 2, single buffered']
    #allocation10 [shape = 'u8[49152]{0}', space=vmem, size = 0xc000, scoped, tag = 'input window, operand 4, single buffered']
    #allocation11 [shape = 's32[1]{0}', space=sflag, size = 0x4, scoped, tag = 'scoped memory for tpu_custom_call.1']
    #allocation12 [shape = 'u8[16384]{0}', space=vmem, size = 0x4000, scoped, tag = 'output window, operand 0']
    %11 = vsyncpa [#allocation5], 0
    %s12 = scalar_lea.sflag [#allocation5], 1
    %13 = vsyncpa %s12, 0
    %14 = vsyncpa [#allocation8], 0
    %15 = vsyncpa [#allocation11], 0
    %16 = vsyncpa [#allocation6], 0
    %s17 = scalar_lea.sflag [#allocation6], 1
    %18 = vsyncpa %s17, 0
    loop: start=0, step=1, limit=6
    $region2: #{tpu_custom_call.1} parent=1 // loop_pre_header
      _
    $region3: #{tpu_custom_call.1} parent=1 // loop_header
      %s20 = sphi 0, %s24
      %p21 = scmp.ge.s32.totalorder %s20, 6
      %s27 = sphi 0, %s39
      %s28 = sphi 0, %s35
      %s29 = sphi 0, %s27
      %s30 = sphi 0, %s28
      %s31 = sphi 0, %s29
      %s32 = sphi 0, %s30
      %s42 = sphi 0, %s44
      %s45 = sphi 0, %s42
      %s46 = sphi 0, %s45
      %s62 = sphi 0, %s46
      %s66 = sphi 0, %s66
      %s68 = sphi 0, %s66
      %s69 = sphi 0, %s68
      %s83 = sphi 0, %s69
      %s87 = sphi 0, %s87
      %s89 = sphi 0, %s87
      %s90 = sphi 0, %s89
      %s104 = sphi 0, %s90
      %s108 = sphi 0, %s108
      %s110 = sphi 0, %s108
      %s111 = sphi 0, %s110
      %s125 = sphi 0, %s111
      %s129 = sphi 0, %s129
      %s131 = sphi 0, %s129
      %s132 = sphi 0, %s131
      %s146 = sphi 0, %s132
      %s150 = sphi 0, %s150
      %s152 = sphi 0, %s150
      %s153 = sphi 0, %s152
      %s167 = sphi 0, %s153
      %s175 = sphi 0, %s177
      %s178 = sphi 0, %s175
      %s179 = sphi 0, %s178
      %s195 = sphi 0, %s179
    $region4: #{tpu_custom_call.1} parent=1 // loop_header_branch
      %23 = sbr.rel (%p21) target = $region8
    $region5: #{tpu_custom_call.1} parent=1 // loop_body
      %s25 = ssub.s32 %s20, 1
      %s26 = ssub.s32 %s20, 2
      %s33 = sadd.s32 1, %s28
      %p34 = scmp.ge.s32.totalorder %s33, 2
      %s35 = scalar_select %p34, 0, %s33
      %s36 = sadd.s32 1, %s27
      %s37 = scalar_select %p34, %s36, %s27
      %p38 = scmp.ge.s32.totalorder %s37, 2
      %s39 = scalar_select %p38, 0, %s37
      %s40 = ssub.s32 %s27, %s39
      %p41 = scmp.eq.s32.totalorder %s40, 0
      %s43 = sadd.s32 %s42, 1
      %s44 = scalar_select %p41, %s42, %s43
      %p47 = pneg %p41
      %p48 = scmp.eq.s32.totalorder %s20, 3
      %p49 = por %p47, %p48
      %p50 = scmp.ne.s32.totalorder %s42, %s45
      %p51 = scmp.eq.s32.totalorder %s20, 0
      %p52 = por %p50, %p51
      %p53 = scmp.ne.s32.totalorder %s42, %s45
      %p54 = scmp.eq.s32.totalorder %s25, 3
      %p55 = por %p53, %p54
      %p56 = scmp.ne.s32.totalorder %s45, %s46
      %p57 = scmp.eq.s32.totalorder %s25, 0
      %p58 = por %p56, %p57
      %p59 = scmp.ne.s32.totalorder %s45, %s46
      %p60 = scmp.eq.s32.totalorder %s26, 3
      %p61 = por %p59, %p60
      %p63 = scmp.ne.s32.totalorder %s46, %s62
      %p64 = scmp.eq.s32.totalorder %s26, 0
      %p65 = por %p63, %p64
      %s67 = sadd.s32 %s66, 1
      %p70 = scmp.eq.s32.totalorder %s20, 3
      %p71 = scmp.ne.s32.totalorder %s66, %s68
      %p72 = scmp.eq.s32.totalorder %s20, 0
      %p73 = por %p71, %p72
      %p74 = scmp.ne.s32.totalorder %s66, %s68
      %p75 = scmp.eq.s32.totalorder %s25, 3
      %p76 = por %p74, %p75
      %p77 = scmp.ne.s32.totalorder %s68, %s69
      %p78 = scmp.eq.s32.totalorder %s25, 0
      %p79 = por %p77, %p78
      %p80 = scmp.ne.s32.totalorder %s68, %s69
      %p81 = scmp.eq.s32.totalorder %s26, 3
      %p82 = por %p80, %p81
      %p84 = scmp.ne.s32.totalorder %s69, %s83
      %p85 = scmp.eq.s32.totalorder %s26, 0
      %p86 = por %p84, %p85
      %s88 = sadd.s32 %s87, 1
      %p91 = scmp.eq.s32.totalorder %s20, 3
      %p92 = scmp.ne.s32.totalorder %s87, %s89
      %p93 = scmp.eq.s32.totalorder %s20, 0
      %p94 = por %p92, %p93
      %p95 = scmp.ne.s32.totalorder %s87, %s89
      %p96 = scmp.eq.s32.totalorder %s25, 3
      %p97 = por %p95, %p96
      %p98 = scmp.ne.s32.totalorder %s89, %s90
      %p99 = scmp.eq.s32.totalorder %s25, 0
      %p100 = por %p98, %p99
      %p101 = scmp.ne.s32.totalorder %s89, %s90
      %p102 = scmp.eq.s32.totalorder %s26, 3
      %p103 = por %p101, %p102
      %p105 = scmp.ne.s32.totalorder %s90, %s104
      %p106 = scmp.eq.s32.totalorder %s26, 0
      %p107 = por %p105, %p106
      %s109 = sadd.s32 %s108, 1
      %p112 = scmp.eq.s32.totalorder %s20, 3
      %p113 = scmp.ne.s32.totalorder %s108, %s110
      %p114 = scmp.eq.s32.totalorder %s20, 0
      %p115 = por %p113, %p114
      %p116 = scmp.ne.s32.totalorder %s108, %s110
      %p117 = scmp.eq.s32.totalorder %s25, 3
      %p118 = por %p116, %p117
      %p119 = scmp.ne.s32.totalorder %s110, %s111
      %p120 = scmp.eq.s32.totalorder %s25, 0
      %p121 = por %p119, %p120
      %p122 = scmp.ne.s32.totalorder %s110, %s111
      %p123 = scmp.eq.s32.totalorder %s26, 3
      %p124 = por %p122, %p123
      %p126 = scmp.ne.s32.totalorder %s111, %s125
      %p127 = scmp.eq.s32.totalorder %s26, 0
      %p128 = por %p126, %p127
      %s130 = sadd.s32 %s129, 1
      %p133 = scmp.eq.s32.totalorder %s20, 3
      %p134 = scmp.ne.s32.totalorder %s129, %s131
      %p135 = scmp.eq.s32.totalorder %s20, 0
      %p136 = por %p134, %p135
      %p137 = scmp.ne.s32.totalorder %s129, %s131
      %p138 = scmp.eq.s32.totalorder %s25, 3
      %p139 = por %p137, %p138
      %p140 = scmp.ne.s32.totalorder %s131, %s132
      %p141 = scmp.eq.s32.totalorder %s25, 0
      %p142 = por %p140, %p141
      %p143 = scmp.ne.s32.totalorder %s131, %s132
      %p144 = scmp.eq.s32.totalorder %s26, 3
      %p145 = por %p143, %p144
      %p147 = scmp.ne.s32.totalorder %s132, %s146
      %p148 = scmp.eq.s32.totalorder %s26, 0
      %p149 = por %p147, %p148
      %s151 = sadd.s32 %s150, 1
      %p154 = scmp.eq.s32.totalorder %s20, 3
      %p155 = scmp.ne.s32.totalorder %s150, %s152
      %p156 = scmp.eq.s32.totalorder %s20, 0
      %p157 = por %p155, %p156
      %p158 = scmp.ne.s32.totalorder %s150, %s152
      %p159 = scmp.eq.s32.totalorder %s25, 3
      %p160 = por %p158, %p159
      %p161 = scmp.ne.s32.totalorder %s152, %s153
      %p162 = scmp.eq.s32.totalorder %s25, 0
      %p163 = por %p161, %p162
      %p164 = scmp.ne.s32.totalorder %s152, %s153
      %p165 = scmp.eq.s32.totalorder %s26, 3
      %p166 = por %p164, %p165
      %p168 = scmp.ne.s32.totalorder %s153, %s167
      %p169 = scmp.eq.s32.totalorder %s26, 0
      %p170 = por %p168, %p169
      %s171 = ssub.s32 %s27, %s39
      %s172 = ssub.s32 %s28, %s35
      %s173 = sor.u32 %s171, %s172
      %p174 = scmp.eq.s32.totalorder %s173, 0
      %s176 = sadd.s32 %s175, 1
      %s177 = scalar_select %p174, %s175, %s176
      %p180 = pneg %p174
      %p181 = scmp.eq.s32.totalorder %s20, 3
      %p182 = por %p180, %p181
      %p183 = scmp.ne.s32.totalorder %s175, %s178
      %p184 = scmp.eq.s32.totalorder %s20, 0
      %p185 = por %p183, %p184
      %p186 = scmp.ne.s32.totalorder %s175, %s178
      %p187 = scmp.eq.s32.totalorder %s25, 3
      %p188 = por %p186, %p187
      %p189 = scmp.ne.s32.totalorder %s178, %s179
      %p190 = scmp.eq.s32.totalorder %s25, 0
      %p191 = por %p189, %p190
      %p192 = scmp.ne.s32.totalorder %s178, %s179
      %p193 = scmp.eq.s32.totalorder %s26, 3
      %p194 = por %p192, %p193
      %p196 = scmp.ne.s32.totalorder %s179, %s195
      %p197 = scmp.eq.s32.totalorder %s26, 0
      %p198 = por %p196, %p197
      %p199 = scmp.le.s32.totalorder 1, %s20
      %p200 = scmp.lt.s32.totalorder %s20, 5
      %p201 = pnand %p199, %p200
      %p202 = pneg %p201
      // Predicated region
      $region9: #{tpu_custom_call.1} parent=5 // pred_check
        _
      $region10: #{tpu_custom_call.1} parent=5 // pred_check_branch
        %204 = sbr.rel (%p201) target = $region12
      $region11: #{tpu_custom_call.1} parent=5 // pred_region
        %s205 = ssub.s32 %s20, 1
        // Predicated region
        $region13: #{tpu_custom_call.1} parent=11 // pred_check
          %p206 = pneg %p79
        $region14: #{tpu_custom_call.1} parent=11 // pred_check_branch
          %208 = sbr.rel (%p206) target = $region16
        $region15: #{tpu_custom_call.1} parent=11 // pred_region
          %s210 = ssub.s32 1024, 1024
          %211 = vsyncadd [#allocation8], %s210
          %s212 = sshll.u32 [#allocation7], 4
          %s213 = int_to_ptr.vmem [resolvable:$true] %s212
          %218 = dma.hbm_to_vmem [thread:$0]  %s1, 1024, %s213, [#allocation8], 128, 128, 8
        $region16: #{tpu_custom_call.1} parent=11 // pred_fallthru
          _
        // Predicated region
        $region17: #{tpu_custom_call.1} parent=11 // pred_check
          %p219 = pneg %p100
        $region18: #{tpu_custom_call.1} parent=11 // pred_check_branch
          %221 = sbr.rel (%p219) target = $region20
        $region19: #{tpu_custom_call.1} parent=11 // pred_region
          %s223 = ssub.s32 1024, 1024
          %224 = vsyncadd [#allocation8], %s223
          %s225 = sshll.u32 [#allocation9], 4
          %s226 = int_to_ptr.vmem [resolvable:$true] %s225
          %231 = dma.hbm_to_vmem [thread:$0]  %s2, 1024, %s226, [#allocation8], 128, 128, 8
        $region20: #{tpu_custom_call.1} parent=11 // pred_fallthru
          _
        // Predicated region
        $region21: #{tpu_custom_call.1} parent=11 // pred_check
          %p232 = pneg %p121
        $region22: #{tpu_custom_call.1} parent=11 // pred_check_branch
          %234 = sbr.rel (%p232) target = $region24
        $region23: #{tpu_custom_call.1} parent=11 // pred_region
          _
        $region24: #{tpu_custom_call.1} parent=11 // pred_fallthru
          _
        // Predicated region
        $region25: #{tpu_custom_call.1} parent=11 // pred_check
          %p235 = pneg %p142
        $region26: #{tpu_custom_call.1} parent=11 // pred_check_branch
          %237 = sbr.rel (%p235) target = $region28
        $region27: #{tpu_custom_call.1} parent=11 // pred_region
          %s239 = ssub.s32 1536, 1536
          %240 = vsyncadd [#allocation11], %s239
          %s241 = sshll.u32 [#allocation10], 4
          %s242 = int_to_ptr.vmem [resolvable:$true] %s241
          %247 = dma.hbm_to_vmem [thread:$0]  %s4, 1536, %s242, [#allocation11], 64, 64, 4
        $region28: #{tpu_custom_call.1} parent=11 // pred_fallthru
          _
        // Predicated region
        $region29: #{tpu_custom_call.1} parent=11 // pred_check
          %p248 = pneg %p163
        $region30: #{tpu_custom_call.1} parent=11 // pred_check_branch
          %250 = sbr.rel (%p248) target = $region32
        $region31: #{tpu_custom_call.1} parent=11 // pred_region
          _
        $region32: #{tpu_custom_call.1} parent=11 // pred_fallthru
          _
      $region12: #{tpu_custom_call.1} parent=5 // pred_fallthru
        _
      %p251 = scmp.lt.s32.totalorder %s20, 4
      // Predicated region
      $region33: #{tpu_custom_call.1} parent=5 // pred_check
        %p252 = pneg %p251
      $region34: #{tpu_custom_call.1} parent=5 // pred_check_branch
        %254 = sbr.rel (%p252) target = $region36
      $region35: #{tpu_custom_call.1} parent=5 // pred_region
        // Predicated region
        $region37: #{tpu_custom_call.1} parent=35 // pred_check
          %p255 = pneg %p52
        $region38: #{tpu_custom_call.1} parent=35 // pred_check_branch
          %257 = sbr.rel (%p255) target = $region40
        $region39: #{tpu_custom_call.1} parent=35 // pred_region
          %s258 = sand.u32 %s42, 1
          %s259 = scalar_lea.sflag [#allocation5], %s258
          %s260 = sand.u32 %s42, 1
          %s261 = smul.addr %s260, 8
          %s262 = scalar_lea.vmem [#allocation4], %s261
          %s264 = ssub.s32 128, 128
          %265 = vsyncadd %s259, %s264
          %s266 = smul.addr %s27, 2
          %s267 = smul.addr %s266, 64
          %s268 = scalar_lea.hbm %s0, %s267
          %s269 = sshll.u32 %s262, 4
          %s270 = int_to_ptr.vmem [resolvable:$true] %s269
          %275 = dma.hbm_to_vmem [thread:$0]  %s268, 128, %s270, %s259, 64, 64, 4
        $region40: #{tpu_custom_call.1} parent=35 // pred_fallthru
          _
      $region36: #{tpu_custom_call.1} parent=5 // pred_fallthru
        _
      %p276 = scmp.le.s32.totalorder 1, %s20
      %p277 = scmp.lt.s32.totalorder %s20, 5
      %p278 = pnand %p276, %p277
      %p279 = pneg %p278
      // Predicated region
      $region41: #{tpu_custom_call.1} parent=5 // pred_check
        _
      $region42: #{tpu_custom_call.1} parent=5 // pred_check_branch
        %281 = sbr.rel (%p278) target = $region44
      $region43: #{tpu_custom_call.1} parent=5 // pred_region
        %s282 = ssub.s32 %s20, 1
        %s283 = sand.u32 %s45, 1
        %s284 = scalar_lea.sflag [#allocation5], %s283
        %s285 = sand.u32 %s45, 1
        %s286 = smul.addr %s285, 8
        %s287 = scalar_lea.vmem [#allocation4], %s286
        // Predicated region
        $region45: #{tpu_custom_call.1} parent=43 // pred_check
          %p288 = pneg %p58
        $region46: #{tpu_custom_call.1} parent=43 // pred_check_branch
          %290 = sbr.rel (%p288) target = $region48
        $region47: #{tpu_custom_call.1} parent=43 // pred_region
          %291 = dma.done %s284, 128
        $region48: #{tpu_custom_call.1} parent=43 // pred_fallthru
          _
        // Predicated region
        $region49: #{tpu_custom_call.1} parent=43 // pred_check
          %p292 = pneg %p79
        $region50: #{tpu_custom_call.1} parent=43 // pred_check_branch
          %294 = sbr.rel (%p292) target = $region52
        $region51: #{tpu_custom_call.1} parent=43 // pred_region
          %295 = dma.done [#allocation8], 1024
        $region52: #{tpu_custom_call.1} parent=43 // pred_fallthru
          _
        // Predicated region
        $region53: #{tpu_custom_call.1} parent=43 // pred_check
          %p296 = pneg %p100
        $region54: #{tpu_custom_call.1} parent=43 // pred_check_branch
          %298 = sbr.rel (%p296) target = $region56
        $region55: #{tpu_custom_call.1} parent=43 // pred_region
          %299 = dma.done [#allocation8], 1024
        $region56: #{tpu_custom_call.1} parent=43 // pred_fallthru
          _
        // Predicated region
        $region57: #{tpu_custom_call.1} parent=43 // pred_check
          %p300 = pneg %p142
        $region58: #{tpu_custom_call.1} parent=43 // pred_check_branch
          %302 = sbr.rel (%p300) target = $region60
        $region59: #{tpu_custom_call.1} parent=43 // pred_region
          %303 = dma.done [#allocation11], 1536
        $region60: #{tpu_custom_call.1} parent=43 // pred_fallthru
          _
        %s304 = sand.u32 %s45, 1
        %s305 = scalar_lea.sflag [#allocation5], %s304
        %s306 = sand.u32 %s45, 1
        %s307 = smul.addr %s306, 8
        %s308 = scalar_lea.vmem [#allocation4], %s307
        %p309 = pneg %p58
        %p310 = pneg %p55
        %p311 = pneg %p79
        %p312 = pneg %p76
        %p313 = pneg %p100
        %p314 = pneg %p97
        %p315 = pneg %p121
        %p316 = pneg %p118
        %p317 = pneg %p142
        %p318 = pneg %p139
        %p319 = pneg %p163
        %p320 = pneg %p160
        %p321 = pneg %p191
        %p322 = pneg %p188
        %s323 = sand.u32 %s178, 1
        %s324 = scalar_lea.sflag [#allocation6], %s323
        %s325 = sand.u32 %s178, 1
        %s326 = smul.addr %s325, 16
        %s327 = scalar_lea.vmem [#allocation12], %s326
        %p329 = scmp.eq.s32.totalorder %s30, 0
        // Predicated region
        $region61: #{tpu_custom_call.1} parent=43 // pred_check
          %p330 = pneg %p329
        $region62: #{tpu_custom_call.1} parent=43 // pred_check_branch
          %332 = sbr.rel (%p330) target = $region64
        $region63: #{tpu_custom_call.1} parent=43 // pred_region
          %v333 = vld [vmem:[%s287] sm:$0xf]
          %v334 = vld [vmem:[%s287 + $0x4] sm:$0xf]
          %v335 = vld [vmem:[#allocation7] sm:$0xff]
          %v336 = vld [vmem:[#allocation7 + $0x8] sm:$0xff]
          %v337 = vld [vmem:[#allocation7 + $0x10] sm:$0xff]
          %v338 = vld [vmem:[#allocation7 + $0x18] sm:$0xff]
          %v339 = vld [vmem:[#allocation7 + $0x20] sm:$0xff]
          %v340 = vld [vmem:[#allocation7 + $0x28] sm:$0xff]
          %v341 = vld [vmem:[#allocation7 + $0x30] sm:$0xff]
          %v342 = vld [vmem:[#allocation7 + $0x38] sm:$0xff]
          %v343 = vld [vmem:[%s3] sm:$0x3]
          %v345 = vlaneseq
          %v346 = vshrl.u32 %v345, 7
          %v347 = vsub.s32 0, %v346
          %v348 = vrot.slane %v343, %v347
          %v349 = vlaneseq
          %v350 = vshrl.u32 %v349, 7
          %v351 = vsub.s32 1, %v350
          %v352 = vrot.slane %v343, %v351
          %v357 = vunpack.c.l.b16 %v333
          %v358 = vunpack.c.l.b16 %v334
          %v359 = vpack.c.b16 %v358, %v357
          %v368 = vunpack.c.l.b16 %v335
          %v369 = vunpack.c.h.b16 %v335
          %v370 = vunpack.c.l.b16 %v336
          %v371 = vunpack.c.h.b16 %v336
          %v372 = vunpack.c.l.b16 %v337
          %v373 = vunpack.c.h.b16 %v337
          %v374 = vunpack.c.l.b16 %v338
          %v375 = vunpack.c.h.b16 %v338
          %v376 = vunpack.c.l.b16 %v339
          %v377 = vunpack.c.h.b16 %v339
          %v378 = vunpack.c.l.b16 %v340
          %v379 = vunpack.c.h.b16 %v340
          %v380 = vunpack.c.l.b16 %v341
          %v381 = vunpack.c.h.b16 %v341
          %v382 = vunpack.c.l.b16 %v342
          %v383 = vunpack.c.h.b16 %v342
          %v384 = vpack.c.b16 %v370, %v368
          %v385 = vpack.c.b16 %v371, %v369
          %v386 = vpack.c.b16 %v374, %v372
          %v387 = vpack.c.b16 %v375, %v373
          %v388 = vpack.c.b16 %v378, %v376
          %v389 = vpack.c.b16 %v379, %v377
          %v390 = vpack.c.b16 %v382, %v380
          %v391 = vpack.c.b16 %v383, %v381
          %vm400 = vcmask 523264
          %v402 = vsel %vm400, %v359, 0
          %404 = vmatprep.subr.bf16.mxu0 %v385
          %405 = vmatpush1.bf16.msra.mxu0 %v384
          %406 = vmatprep.subr.bf16.mxu0 %v387
          %407 = vmatpush1.bf16.msra.mxu0 %v386
          %408 = vmatprep.subr.bf16.mxu0 %v389
          %409 = vmatpush1.bf16.msra.mxu0 %v388
          %410 = vmatprep.subr.bf16.mxu0 %v391
          %411 = vmatpush1.bf16.msra.mxu0 %v390
          %412 = vmatprep.subr.bf16.mxu0 0
          %413 = vmatpush1.bf16.msra.mxu0 0
          %414 = vmatprep.subr.bf16.mxu0 0
          %415 = vmatpush1.bf16.msra.mxu0 0
          %416 = vmatprep.subr.bf16.mxu0 0
          %417 = vmatpush1.bf16.msra.mxu0 0
          %418 = vmatprep.subr.bf16.mxu0 0
          %419 = vmatpush1.bf16.msra.mxu0 0
          %420 = vmatprep.subr.bf16.mxu0 0
          %421 = vmatpush1.bf16.msra.mxu0 0
          %422 = vmatprep.subr.bf16.mxu0 0
          %423 = vmatpush1.bf16.msra.mxu0 0
          %424 = vmatprep.subr.bf16.mxu0 0
          %425 = vmatpush1.bf16.msra.mxu0 0
          %426 = vmatprep.subr.bf16.mxu0 0
          %427 = vmatpush1.bf16.msra.mxu0 0
          %428 = vmatprep.subr.bf16.mxu0 0
          %429 = vmatpush1.bf16.msra.mxu0 0
          %430 = vmatprep.subr.bf16.mxu0 0
          %431 = vmatpush1.bf16.msra.mxu0 0
          %432 = vmatprep.subr.bf16.mxu0 0
          %433 = vmatpush1.bf16.msra.mxu0 0
          %434 = vmatprep.subr.bf16.mxu0 0
          %435 = vmatpush1.bf16.msra.mxu0 0
          %436 = vmatprep.mubr.bf16.mxu0 0
          %437 = vmatmul.mubr.bf16.gmra.mrb[0].mxu0 %v402
          %v438 = vpop.f32.mrb[0].mxu0
          %v439 = vadd.f32 %v348, %v438
          %v440 = vpop.f32.mrb[0].mxu0
          %v441 = vadd.f32 %v352, %v440
          %v442 = vpop.f32.mrb[0].mxu0
          %v443 = vadd.f32 %v348, %v442
          %v444 = vpop.f32.mrb[0].mxu0
          %v445 = vadd.f32 %v352, %v444
          %446 = vdwg.mxu0
          %447 = vst [vmem:[#allocation2] sm:$0xff] %v439
          %448 = vst.msk [vmem:[#allocation2 + $0x8] sm:$0xff] %vm400, %v441
          %449 = vst [vmem:[#allocation2 + $0x10] sm:$0xff] %v443
          %450 = vst.msk [vmem:[#allocation2 + $0x18] sm:$0xff] %vm400, %v445
          %v451 = vld [vmem:[#allocation9] sm:$0xff]
          %v452 = vld [vmem:[#allocation9 + $0x8] sm:$0xff]
          %v453 = vld [vmem:[#allocation9 + $0x10] sm:$0xff]
          %v454 = vld [vmem:[#allocation9 + $0x18] sm:$0xff]
          %v455 = vld [vmem:[#allocation9 + $0x20] sm:$0xff]
          %v456 = vld [vmem:[#allocation9 + $0x28] sm:$0xff]
          %v457 = vld [vmem:[#allocation9 + $0x30] sm:$0xff]
          %v458 = vld [vmem:[#allocation9 + $0x38] sm:$0xff]
          %v467 = vunpack.c.l.b16 %v451
          %v468 = vunpack.c.h.b16 %v451
          %v469 = vunpack.c.l.b16 %v452
          %v470 = vunpack.c.h.b16 %v452
          %v471 = vunpack.c.l.b16 %v453
          %v472 = vunpack.c.h.b16 %v453
          %v473 = vunpack.c.l.b16 %v454
          %v474 = vunpack.c.h.b16 %v454
          %v475 = vunpack.c.l.b16 %v455
          %v476 = vunpack.c.h.b16 %v455
          %v477 = vunpack.c.l.b16 %v456
          %v478 = vunpack.c.h.b16 %v456
          %v479 = vunpack.c.l.b16 %v457
          %v480 = vunpack.c.h.b16 %v457
          %v481 = vunpack.c.l.b16 %v458
          %v482 = vunpack.c.h.b16 %v458
          %v483 = vpack.c.b16 %v469, %v467
          %v484 = vpack.c.b16 %v470, %v468
          %v485 = vpack.c.b16 %v473, %v471
          %v486 = vpack.c.b16 %v474, %v472
          %v487 = vpack.c.b16 %v477, %v475
          %v488 = vpack.c.b16 %v478, %v476
          %v489 = vpack.c.b16 %v481, %v479
          %v490 = vpack.c.b16 %v482, %v480
          %499 = vmatprep.subr.bf16.mxu0 %v484
          %500 = vmatpush1.bf16.msra.mxu0 %v483
          %501 = vmatprep.subr.bf16.mxu0 %v486
          %502 = vmatpush1.bf16.msra.mxu0 %v485
          %503 = vmatprep.subr.bf16.mxu0 %v488
          %504 = vmatpush1.bf16.msra.mxu0 %v487
          %505 = vmatprep.subr.bf16.mxu0 %v490
          %506 = vmatpush1.bf16.msra.mxu0 %v489
          %507 = vmatprep.subr.bf16.mxu0 0
          %508 = vmatpush1.bf16.msra.mxu0 0
          %509 = vmatprep.subr.bf16.mxu0 0
          %510 = vmatpush1.bf16.msra.mxu0 0
          %511 = vmatprep.subr.bf16.mxu0 0
          %512 = vmatpush1.bf16.msra.mxu0 0
          %513 = vmatprep.subr.bf16.mxu0 0
          %514 = vmatpush1.bf16.msra.mxu0 0
          %515 = vmatprep.subr.bf16.mxu0 0
          %516 = vmatpush1.bf16.msra.mxu0 0
          %517 = vmatprep.subr.bf16.mxu0 0
          %518 = vmatpush1.bf16.msra.mxu0 0
          %519 = vmatprep.subr.bf16.mxu0 0
          %520 = vmatpush1.bf16.msra.mxu0 0
          %521 = vmatprep.subr.bf16.mxu0 0
          %522 = vmatpush1.bf16.msra.mxu0 0
          %523 = vmatprep.subr.bf16.mxu0 0
          %524 = vmatpush1.bf16.msra.mxu0 0
          %525 = vmatprep.subr.bf16.mxu0 0
          %526 = vmatpush1.bf16.msra.mxu0 0
          %527 = vmatprep.subr.bf16.mxu0 0
          %528 = vmatpush1.bf16.msra.mxu0 0
          %529 = vmatprep.subr.bf16.mxu0 0
          %530 = vmatpush1.bf16.msra.mxu0 0
          %531 = vmatprep.mubr.bf16.mxu0 0
          %532 = vmatmul.mubr.bf16.gmra.mrb[0].mxu0 %v402
          %v533 = vpop.f32.mrb[0].mxu0
          %v534 = vadd.f32 0.0, %v533
          %v535 = vpop.f32.mrb[0].mxu0
          %v536 = vadd.f32 0.0, %v535
          %v537 = vpop.f32.mrb[0].mxu0
          %v538 = vadd.f32 0.0, %v537
          %v539 = vpop.f32.mrb[0].mxu0
          %v540 = vadd.f32 0.0, %v539
          %541 = vdwg.mxu0
          %542 = vst [vmem:[#allocation3] sm:$0xff] %v534
          %543 = vst.msk [vmem:[#allocation3 + $0x8] sm:$0xff] %vm400, %v536
          %544 = vst [vmem:[#allocation3 + $0x10] sm:$0xff] %v538
          %545 = vst.msk [vmem:[#allocation3 + $0x18] sm:$0xff] %vm400, %v540
        $region64: #{tpu_custom_call.1} parent=43 // pred_fallthru
          _
        %s546 = smul.u32 %s30, 8
        %s547 = sshra.s32 %s546, 3
        %s548 = sand.u32 %s546, 7
        %s549 = smul.u32 %s547, 2
        %s550 = smul.addr %s549, 8
        %s551 = scalar_lea.vmem [#allocation2], %s550
        %v552 = vld [vmem:[%s551] sm:$0xff]
        %v553 = vld [vmem:[%s551 + $0x8] sm:$0xff]
        %v556 = vcombine.low %v552, %v553
        %v557 = vcombine.high %v552, %v553
        %v559 = vunpack.c.l.s4 1966171168
        %v560 = vunpack.c.0.s8 %v559
        %v561 = vlaneseq
        %v562 = vshrl.u32 %v561, 7
        %v563 = vsub.s32 %v560, %v562
        %v564 = vrot.slane %v556, %v563
        %v566 = vunpack.c.l.s4 1966171168
        %v567 = vunpack.c.0.s8 %v566
        %v568 = vlaneseq
        %v569 = vshrl.u32 %v568, 7
        %v570 = vsub.s32 %v567, %v569
        %v571 = vrot.slane %v557, %v570
        %v572 = vcombine.high %v564, %v564
        %v573 = vcombine.high %v571, %v571
        %v575 = vunpack.c.l.s4 1966171168
        %v576 = vunpack.c.0.s8 %v575
        %v577 = vlaneseq
        %v578 = vshrl.u32 %v577, 7
        %v579 = vsub.s32 %v576, %v578
        %v580 = vrot.slane %v564, %v579
        %v582 = vunpack.c.l.s4 1966171168
        %v583 = vunpack.c.0.s8 %v582
        %v584 = vlaneseq
        %v585 = vshrl.u32 %v584, 7
        %v586 = vsub.s32 %v583, %v585
        %v587 = vrot.slane %v571, %v586
        %v589 = vunpack.c.l.s4 1966171168
        %v590 = vunpack.c.0.s8 %v589
        %v591 = vlaneseq
        %v592 = vshrl.u32 %v591, 7
        %v593 = vsub.s32 %v590, %v592
        %v594 = vrot.slane %v572, %v593
        %v596 = vunpack.c.l.s4 1966171168
        %v597 = vunpack.c.0.s8 %v596
        %v598 = vlaneseq
        %v599 = vshrl.u32 %v598, 7
        %v600 = vsub.s32 %v597, %v599
        %v601 = vrot.slane %v573, %v600
        %v602 = vcombine.high %v580, %v580
        %v603 = vcombine.high %v587, %v587
        %v604 = vcombine.high %v594, %v594
        %v605 = vcombine.high %v601, %v601
        %v606 = vld [vmem:[#allocation3] sm:$0xff]
        %v607 = vld [vmem:[#allocation3 + $0x8] sm:$0xff]
        %v608 = vld [vmem:[#allocation3 + $0x10] sm:$0xff]
        %v609 = vld [vmem:[#allocation3 + $0x18] sm:$0xff]
        %v610 = vlaneseq
        %v611 = vshrl.u32 %v610, 7
        %v612 = vsub.s32 0, %v611
        %v613 = vrot.slane %v580, %v612
        %v614 = vlaneseq
        %v615 = vshrl.u32 %v614, 7
        %v616 = vsub.s32 1, %v615
        %v617 = vrot.slane %v580, %v616
        %v618 = vlaneseq
        %v619 = vshrl.u32 %v618, 7
        %v620 = vsub.s32 0, %v619
        %v621 = vrot.slane %v594, %v620
        %v622 = vlaneseq
        %v623 = vshrl.u32 %v622, 7
        %v624 = vsub.s32 1, %v623
        %v625 = vrot.slane %v594, %v624
        %v626 = vlaneseq
        %v627 = vshrl.u32 %v626, 7
        %v628 = vsub.s32 0, %v627
        %v629 = vrot.slane %v602, %v628
        %v630 = vlaneseq
        %v631 = vshrl.u32 %v630, 7
        %v632 = vsub.s32 1, %v631
        %v633 = vrot.slane %v602, %v632
        %v634 = vlaneseq
        %v635 = vshrl.u32 %v634, 7
        %v636 = vsub.s32 0, %v635
        %v637 = vrot.slane %v604, %v636
        %v638 = vlaneseq
        %v639 = vshrl.u32 %v638, 7
        %v640 = vsub.s32 1, %v639
        %v641 = vrot.slane %v604, %v640
        %v642 = vlaneseq
        %v643 = vshrl.u32 %v642, 7
        %v644 = vsub.s32 0, %v643
        %v645 = vrot.slane %v587, %v644
        %v646 = vlaneseq
        %v647 = vshrl.u32 %v646, 7
        %v648 = vsub.s32 1, %v647
        %v649 = vrot.slane %v587, %v648
        %v650 = vlaneseq
        %v651 = vshrl.u32 %v650, 7
        %v652 = vsub.s32 0, %v651
        %v653 = vrot.slane %v601, %v652
        %v654 = vlaneseq
        %v655 = vshrl.u32 %v654, 7
        %v656 = vsub.s32 1, %v655
        %v657 = vrot.slane %v601, %v656
        %v658 = vlaneseq
        %v659 = vshrl.u32 %v658, 7
        %v660 = vsub.s32 0, %v659
        %v661 = vrot.slane %v603, %v660
        %v662 = vlaneseq
        %v663 = vshrl.u32 %v662, 7
        %v664 = vsub.s32 1, %v663
        %v665 = vrot.slane %v603, %v664
        %v666 = vlaneseq
        %v667 = vshrl.u32 %v666, 7
        %v668 = vsub.s32 0, %v667
        %v669 = vrot.slane %v605, %v668
        %v670 = vlaneseq
        %v671 = vshrl.u32 %v670, 7
        %v672 = vsub.s32 1, %v671
        %v673 = vrot.slane %v605, %v672
        %v690 = vadd.f32 %v613, %v606
        %v691 = vadd.f32 %v617, %v607
        %v692 = vadd.f32 %v613, %v608
        %v693 = vadd.f32 %v617, %v609
        %v694 = vadd.f32 %v621, %v606
        %v695 = vadd.f32 %v625, %v607
        %v696 = vadd.f32 %v621, %v608
        %v697 = vadd.f32 %v625, %v609
        %v698 = vadd.f32 %v629, %v606
        %v699 = vadd.f32 %v633, %v607
        %v700 = vadd.f32 %v629, %v608
        %v701 = vadd.f32 %v633, %v609
        %v702 = vadd.f32 %v637, %v606
        %v703 = vadd.f32 %v641, %v607
        %v704 = vadd.f32 %v637, %v608
        %v705 = vadd.f32 %v641, %v609
        %v706 = vadd.f32 %v645, %v606
        %v707 = vadd.f32 %v649, %v607
        %v708 = vadd.f32 %v645, %v608
        %v709 = vadd.f32 %v649, %v609
        %v710 = vadd.f32 %v653, %v606
        %v711 = vadd.f32 %v657, %v607
        %v712 = vadd.f32 %v653, %v608
        %v713 = vadd.f32 %v657, %v609
        %v714 = vadd.f32 %v661, %v606
        %v715 = vadd.f32 %v665, %v607
        %v716 = vadd.f32 %v661, %v608
        %v717 = vadd.f32 %v665, %v609
        %v718 = vadd.f32 %v669, %v606
        %v719 = vadd.f32 %v673, %v607
        %v720 = vadd.f32 %v669, %v608
        %v721 = vadd.f32 %v673, %v609
        %v722 = vmax.f32 %v690, 0.0
        %v723 = vmax.f32 %v691, 0.0
        %v724 = vmax.f32 %v692, 0.0
        %v725 = vmax.f32 %v693, 0.0
        %v726 = vmax.f32 %v694, 0.0
        %v727 = vmax.f32 %v695, 0.0
        %v728 = vmax.f32 %v696, 0.0
        %v729 = vmax.f32 %v697, 0.0
        %v730 = vmax.f32 %v698, 0.0
        %v731 = vmax.f32 %v699, 0.0
        %v732 = vmax.f32 %v700, 0.0
        %v733 = vmax.f32 %v701, 0.0
        %v734 = vmax.f32 %v702, 0.0
        %v735 = vmax.f32 %v703, 0.0
        %v736 = vmax.f32 %v704, 0.0
        %v737 = vmax.f32 %v705, 0.0
        %v738 = vmax.f32 %v706, 0.0
        %v739 = vmax.f32 %v707, 0.0
        %v740 = vmax.f32 %v708, 0.0
        %v741 = vmax.f32 %v709, 0.0
        %v742 = vmax.f32 %v710, 0.0
        %v743 = vmax.f32 %v711, 0.0
        %v744 = vmax.f32 %v712, 0.0
        %v745 = vmax.f32 %v713, 0.0
        %v746 = vmax.f32 %v714, 0.0
        %v747 = vmax.f32 %v715, 0.0
        %v748 = vmax.f32 %v716, 0.0
        %v749 = vmax.f32 %v717, 0.0
        %v750 = vmax.f32 %v718, 0.0
        %v751 = vmax.f32 %v719, 0.0
        %v752 = vmax.f32 %v720, 0.0
        %v753 = vmax.f32 %v721, 0.0
        %v754 = vpack.c.bf16 %v724, %v722
        %v755 = vpack.c.bf16 %v725, %v723
        %v756 = vpack.c.bf16 %v728, %v726
        %v757 = vpack.c.bf16 %v729, %v727
        %v758 = vpack.c.bf16 %v732, %v730
        %v759 = vpack.c.bf16 %v733, %v731
        %v760 = vpack.c.bf16 %v736, %v734
        %v761 = vpack.c.bf16 %v737, %v735
        %v762 = vpack.c.bf16 %v740, %v738
        %v763 = vpack.c.bf16 %v741, %v739
        %v764 = vpack.c.bf16 %v744, %v742
        %v765 = vpack.c.bf16 %v745, %v743
        %v766 = vpack.c.bf16 %v748, %v746
        %v767 = vpack.c.bf16 %v749, %v747
        %v768 = vpack.c.bf16 %v752, %v750
        %v769 = vpack.c.bf16 %v753, %v751
        %v770 = vld [vmem:[#allocation10] sm:$0xf]
        %v771 = vld [vmem:[#allocation10 + $0x4] sm:$0xf]
        %v772 = vld [vmem:[#allocation10 + $0x8] sm:$0xf]
        %v773 = vld [vmem:[#allocation10 + $0xc] sm:$0xf]
        %v774 = vld [vmem:[#allocation10 + $0x10] sm:$0xf]
        %v775 = vld [vmem:[#allocation10 + $0x14] sm:$0xf]
        %v776 = vld [vmem:[#allocation10 + $0x18] sm:$0xf]
        %v777 = vld [vmem:[#allocation10 + $0x1c] sm:$0xf]
        %v778 = vld [vmem:[#allocation10 + $0x20] sm:$0xf]
        %v779 = vld [vmem:[#allocation10 + $0x24] sm:$0xf]
        %v780 = vld [vmem:[#allocation10 + $0x28] sm:$0xf]
        %v781 = vld [vmem:[#allocation10 + $0x2c] sm:$0xf]
        %v782 = vld [vmem:[#allocation10 + $0x30] sm:$0xf]
        %v783 = vld [vmem:[#allocation10 + $0x34] sm:$0xf]
        %v784 = vld [vmem:[#allocation10 + $0x38] sm:$0xf]
        %v785 = vld [vmem:[#allocation10 + $0x3c] sm:$0xf]
        %v786 = vld [vmem:[#allocation10 + $0x40] sm:$0xf]
        %v787 = vld [vmem:[#allocation10 + $0x44] sm:$0xf]
        %v788 = vld [vmem:[#allocation10 + $0x48] sm:$0xf]
        %v789 = vld [vmem:[#allocation10 + $0x4c] sm:$0xf]
        %v790 = vld [vmem:[#allocation10 + $0x50] sm:$0xf]
        %v791 = vld [vmem:[#allocation10 + $0x54] sm:$0xf]
        %v792 = vld [vmem:[#allocation10 + $0x58] sm:$0xf]
        %v793 = vld [vmem:[#allocation10 + $0x5c] sm:$0xf]
        %v818 = vunpack.c.l.b16 %v770
        %v819 = vunpack.c.l.b16 %v771
        %v820 = vunpack.c.l.b16 %v772
        %v821 = vunpack.c.l.b16 %v773
        %v822 = vunpack.c.l.b16 %v774
        %v823 = vunpack.c.l.b16 %v775
        %v824 = vunpack.c.l.b16 %v776
        %v825 = vunpack.c.l.b16 %v777
        %v826 = vunpack.c.l.b16 %v778
        %v827 = vunpack.c.l.b16 %v779
        %v828 = vunpack.c.l.b16 %v780
        %v829 = vunpack.c.l.b16 %v781
        %v830 = vunpack.c.l.b16 %v782
        %v831 = vunpack.c.l.b16 %v783
        %v832 = vunpack.c.l.b16 %v784
        %v833 = vunpack.c.l.b16 %v785
        %v834 = vunpack.c.l.b16 %v786
        %v835 = vunpack.c.l.b16 %v787
        %v836 = vunpack.c.l.b16 %v788
        %v837 = vunpack.c.l.b16 %v789
        %v838 = vunpack.c.l.b16 %v790
        %v839 = vunpack.c.l.b16 %v791
        %v840 = vunpack.c.l.b16 %v792
        %v841 = vunpack.c.l.b16 %v793
        %v842 = vpack.c.b16 %v819, %v818
        %v843 = vpack.c.b16 %v821, %v820
        %v844 = vpack.c.b16 %v823, %v822
        %v845 = vpack.c.b16 %v825, %v824
        %v846 = vpack.c.b16 %v827, %v826
        %v847 = vpack.c.b16 %v829, %v828
        %v848 = vpack.c.b16 %v831, %v830
        %v849 = vpack.c.b16 %v833, %v832
        %v850 = vpack.c.b16 %v835, %v834
        %v851 = vpack.c.b16 %v837, %v836
        %v852 = vpack.c.b16 %v839, %v838
        %v853 = vpack.c.b16 %v841, %v840
        %vm866 = vcmask 523264
        %v868 = vsel %vm866, %v755, 0
        %v871 = vsel %vm866, %v757, 0
        %v874 = vsel %vm866, %v759, 0
        %v877 = vsel %vm866, %v761, 0
        %v880 = vsel %vm866, %v763, 0
        %v883 = vsel %vm866, %v765, 0
        %v886 = vsel %vm866, %v767, 0
        %v889 = vsel %vm866, %v769, 0
        %891 = vmatprep.subr.bf16.mxu0 0
        %892 = vmatpush1.bf16.msra.mxu0 %v842
        %893 = vmatprep.subr.bf16.mxu0 0
        %894 = vmatpush1.bf16.msra.mxu0 %v843
        %895 = vmatprep.subr.bf16.mxu0 0
        %896 = vmatpush1.bf16.msra.mxu0 %v844
        %897 = vmatprep.subr.bf16.mxu0 0
        %898 = vmatpush1.bf16.msra.mxu0 %v845
        %899 = vmatprep.subr.bf16.mxu0 0
        %900 = vmatpush1.bf16.msra.mxu0 %v846
        %901 = vmatprep.subr.bf16.mxu0 0
        %902 = vmatpush1.bf16.msra.mxu0 %v847
        %903 = vmatprep.subr.bf16.mxu0 0
        %904 = vmatpush1.bf16.msra.mxu0 %v848
        %905 = vmatprep.subr.bf16.mxu0 0
        %906 = vmatpush1.bf16.msra.mxu0 %v849
        %907 = vmatprep.subr.bf16.mxu0 0
        %908 = vmatpush1.bf16.msra.mxu0 %v850
        %909 = vmatprep.subr.bf16.mxu0 0
        %910 = vmatpush1.bf16.msra.mxu0 %v851
        %911 = vmatprep.subr.bf16.mxu0 0
        %912 = vmatpush1.bf16.msra.mxu0 %v852
        %913 = vmatprep.subr.bf16.mxu0 0
        %914 = vmatpush1.bf16.msra.mxu0 %v853
        %915 = vmatprep.subr.bf16.mxu0 0
        %916 = vmatpush1.bf16.msra.mxu0 0
        %917 = vmatprep.subr.bf16.mxu0 0
        %918 = vmatpush1.bf16.msra.mxu0 0
        %919 = vmatprep.subr.bf16.mxu0 0
        %920 = vmatpush1.bf16.msra.mxu0 0
        %921 = vmatprep.subr.bf16.mxu0 0
        %922 = vmatpush1.bf16.msra.mxu0 0
        %923 = vmatprep.mubr.bf16.mxu0 %v868
        %924 = vmatmul.mubr.bf16.gmra.mrb[0].mxu0 %v754
        %v925 = vpop.f32.mrb[0].mxu0
        %v926 = vadd.f32 0.0, %v925
        %v927 = vpop.f32.mrb[0].mxu0
        %v928 = vpop.f32.mrb[0].mxu0
        %v929 = vadd.f32 0.0, %v928
        %v930 = vpop.f32.mrb[0].mxu0
        %931 = vmatprep.mubr.bf16.mxu0 %v871
        %932 = vmatmul.mubr.bf16.gmra.mrb[0].mxu0 %v756
        %v933 = vpop.f32.mrb[0].mxu0
        %v934 = vadd.f32 0.0, %v933
        %v935 = vpop.f32.mrb[0].mxu0
        %v936 = vpop.f32.mrb[0].mxu0
        %v937 = vadd.f32 0.0, %v936
        %v938 = vpop.f32.mrb[0].mxu0
        %939 = vmatprep.mubr.bf16.mxu0 %v874
        %940 = vmatmul.mubr.bf16.gmra.mrb[0].mxu0 %v758
        %v941 = vpop.f32.mrb[0].mxu0
        %v942 = vadd.f32 0.0, %v941
        %v943 = vpop.f32.mrb[0].mxu0
        %v944 = vpop.f32.mrb[0].mxu0
        %v945 = vadd.f32 0.0, %v944
        %v946 = vpop.f32.mrb[0].mxu0
        %947 = vmatprep.mubr.bf16.mxu0 %v877
        %948 = vmatmul.mubr.bf16.gmra.mrb[0].mxu0 %v760
        %v949 = vpop.f32.mrb[0].mxu0
        %v950 = vadd.f32 0.0, %v949
        %v951 = vpop.f32.mrb[0].mxu0
        %v952 = vpop.f32.mrb[0].mxu0
        %v953 = vadd.f32 0.0, %v952
        %v954 = vpop.f32.mrb[0].mxu0
        %955 = vmatprep.mubr.bf16.mxu0 %v880
        %956 = vmatmul.mubr.bf16.gmra.mrb[0].mxu0 %v762
        %v957 = vpop.f32.mrb[0].mxu0
        %v958 = vadd.f32 0.0, %v957
        %v959 = vpop.f32.mrb[0].mxu0
        %v960 = vpop.f32.mrb[0].mxu0
        %v961 = vadd.f32 0.0, %v960
        %v962 = vpop.f32.mrb[0].mxu0
        %963 = vmatprep.mubr.bf16.mxu0 %v883
        %964 = vmatmul.mubr.bf16.gmra.mrb[0].mxu0 %v764
        %v965 = vpop.f32.mrb[0].mxu0
        %v966 = vadd.f32 0.0, %v965
        %v967 = vpop.f32.mrb[0].mxu0
        %v968 = vpop.f32.mrb[0].mxu0
        %v969 = vadd.f32 0.0, %v968
        %v970 = vpop.f32.mrb[0].mxu0
        %971 = vmatprep.mubr.bf16.mxu0 %v886
        %972 = vmatmul.mubr.bf16.gmra.mrb[0].mxu0 %v766
        %v973 = vpop.f32.mrb[0].mxu0
        %v974 = vadd.f32 0.0, %v973
        %v975 = vpop.f32.mrb[0].mxu0
        %v976 = vpop.f32.mrb[0].mxu0
        %v977 = vadd.f32 0.0, %v976
        %v978 = vpop.f32.mrb[0].mxu0
        %979 = vmatprep.mubr.bf16.mxu0 %v889
        %980 = vmatmul.mubr.bf16.gmra.mrb[0].mxu0 %v768
        %v981 = vpop.f32.mrb[0].mxu0
        %v982 = vadd.f32 0.0, %v981
        %v983 = vpop.f32.mrb[0].mxu0
        %v984 = vpop.f32.mrb[0].mxu0
        %v985 = vadd.f32 0.0, %v984
        %v986 = vpop.f32.mrb[0].mxu0
        %987 = vdwg.mxu0
        %v988 = vld [vmem:[%s5] sm:$0x1]
        %v990 = vlaneseq
        %v991 = vshrl.u32 %v990, 7
        %v992 = vsub.s32 0, %v991
        %v993 = vrot.slane %v988, %v992
        %v995 = vadd.f32 %v926, %v993
        %v996 = vadd.f32 %v929, %v993
        %v997 = vadd.f32 %v934, %v993
        %v998 = vadd.f32 %v937, %v993
        %v999 = vadd.f32 %v942, %v993
        %v1000 = vadd.f32 %v945, %v993
        %v1001 = vadd.f32 %v950, %v993
        %v1002 = vadd.f32 %v953, %v993
        %v1003 = vadd.f32 %v958, %v993
        %v1004 = vadd.f32 %v961, %v993
        %v1005 = vadd.f32 %v966, %v993
        %v1006 = vadd.f32 %v969, %v993
        %v1007 = vadd.f32 %v974, %v993
        %v1008 = vadd.f32 %v977, %v993
        %v1009 = vadd.f32 %v982, %v993
        %v1010 = vadd.f32 %v985, %v993
        %1011 = vxpose.xlu0.b32.start [1/16] %v995, 128
        %1012 = vxpose.xlu0.b32.cont [2/16] %v996, 128
        %1013 = vxpose.xlu0.b32.cont [3/16] %v997, 128
        %1014 = vxpose.xlu0.b32.cont [4/16] %v998, 128
        %1015 = vxpose.xlu0.b32.cont [5/16] %v999, 128
        %1016 = vxpose.xlu0.b32.cont [6/16] %v1000, 128
        %1017 = vxpose.xlu0.b32.cont [7/16] %v1001, 128
        %1018 = vxpose.xlu0.b32.cont [8/16] %v1002, 128
        %1019 = vxpose.xlu0.b32.cont [9/16] %v1003, 128
        %1020 = vxpose.xlu0.b32.cont [10/16] %v1004, 128
        %1021 = vxpose.xlu0.b32.cont [11/16] %v1005, 128
        %1022 = vxpose.xlu0.b32.cont [12/16] %v1006, 128
        %1023 = vxpose.xlu0.b32.cont [13/16] %v1007, 128
        %1024 = vxpose.xlu0.b32.cont [14/16] %v1008, 128
        %1025 = vxpose.xlu0.b32.cont [15/16] %v1009, 128
        %1026 = vxpose.xlu0.b32.end [16/16] %v1010, 128
        %v1027 = vpop.trf.xlu0
        %v1028 = vpop.trf.xlu0
        %v1029 = vpop.trf.xlu0
        %v1030 = vpop.trf.xlu0
        %v1031 = vpop.trf.xlu0
        %v1032 = vpop.trf.xlu0
        %v1033 = vpop.trf.xlu0
        %v1034 = vpop.trf.xlu0
        %v1035 = vpop.trf.xlu0
        %v1036 = vpop.trf.xlu0
        %v1037 = vpop.trf.xlu0
        %v1038 = vpop.trf.xlu0
        %v1039 = vpop.trf.xlu0
        %v1040 = vpop.trf.xlu0
        %v1041 = vpop.trf.xlu0
        %v1042 = vpop.trf.xlu0
        %1043 = vst [vmem:[%s327] sm:$0xff] %v1027
        %1044 = vst [vmem:[%s327 + $0x8] sm:$0xff] %v1028
        %s1045 = sand.u32 %s178, 1
        %s1046 = scalar_lea.sflag [#allocation6], %s1045
        %s1047 = sand.u32 %s178, 1
        %s1048 = smul.addr %s1047, 16
        %s1049 = scalar_lea.vmem [#allocation12], %s1048
        // Predicated region
        $region65: #{tpu_custom_call.1} parent=43 // pred_check
          %p1050 = pneg %p188
        $region66: #{tpu_custom_call.1} parent=43 // pred_check_branch
          %1052 = sbr.rel (%p1050) target = $region68
        $region67: #{tpu_custom_call.1} parent=43 // pred_region
          %s1054 = ssub.s32 256, 256
          %1055 = vsyncadd %s1046, %s1054
          %s1056 = smul.addr %s29, 4
          %s1057 = sadd.s32 %s30, %s1056
          %s1058 = smul.addr %s1057, 128
          %s1059 = scalar_lea.hbm %s6, %s1058
          %s1060 = sshll.u32 %s1049, 4
          %s1061 = int_to_ptr.vmem [resolvable:$true] %s1060
          %1066 = dma.vmem_to_hbm [thread:$0]  %s1061, 256, %s1059, %s1046, 128, 256, 8
        $region68: #{tpu_custom_call.1} parent=43 // pred_fallthru
          _
      $region44: #{tpu_custom_call.1} parent=5 // pred_fallthru
        _
      %p1067 = scmp.le.s32.totalorder 2, %s20
      // Predicated region
      $region69: #{tpu_custom_call.1} parent=5 // pred_check
        %p1068 = pneg %p1067
      $region70: #{tpu_custom_call.1} parent=5 // pred_check_branch
        %1070 = sbr.rel (%p1068) target = $region72
      $region71: #{tpu_custom_call.1} parent=5 // pred_region
        %s1071 = ssub.s32 %s20, 2
        // Predicated region
        $region73: #{tpu_custom_call.1} parent=71 // pred_check
          %p1072 = pneg %p194
        $region74: #{tpu_custom_call.1} parent=71 // pred_check_branch
          %1074 = sbr.rel (%p1072) target = $region76
        $region75: #{tpu_custom_call.1} parent=71 // pred_region
          %s1075 = sand.u32 %s179, 1
          %s1076 = scalar_lea.sflag [#allocation6], %s1075
          %s1077 = sand.u32 %s179, 1
          %s1078 = smul.addr %s1077, 16
          %s1079 = scalar_lea.vmem [#allocation12], %s1078
          %1080 = dma.done %s1076, 256
        $region76: #{tpu_custom_call.1} parent=71 // pred_fallthru
          _
      $region72: #{tpu_custom_call.1} parent=5 // pred_fallthru
        _
    $region6: #{tpu_custom_call.1} parent=1 // loop_footer
      %s24 = sadd.s32 1, %s20
    $region7: #{tpu_custom_call.1} parent=1 // loop_footer_branch
      %19 = sbr.rel target = $region3
    $region8: #{tpu_custom_call.1} parent=1 // loop_exit
      _
    %1081 = vsyncpa [#allocation5], 1
    %s1082 = scalar_lea.sflag [#allocation5], 1
    %1083 = vsyncpa %s1082, 1
    %1084 = vsyncpa [#allocation8], 1
    %1085 = vsyncpa [#allocation11], 1
    %1086 = vsyncpa [#allocation6], 1
    %s1087 = scalar_lea.sflag [#allocation6], 1
    %1088 = vsyncpa %s1087, 1

// kernel: tpu_custom_call.1
$region0: #{tpu_custom_call.1}
  #allocation0 [shape = 'u32[]', space=smem, size = 0x4, offset = 0x4, fixed_abs, tag = 'smem constant byte address 0x4 - core index']
  #allocation1 [shape = 'u32[144,128]{1,0:T(1,128)}', space=vmem, size = 0x12000, scoped, tag = 'internal scratch']
  #allocation2 [shape = 'f32[16,192]{1,0:T(8,128)}', space=vmem, size = 0x4000, scoped, tag = 'scratch operand']
  #allocation3 [shape = 'f32[16,192]{1,0:T(8,128)}', space=vmem, size = 0x4000, scoped, tag = 'scratch operand']
  %s0 = inlined_call_operand.hbm [shape: bf16[2,16,64], index: 0, kind: input, shape index: {}]
  %s1 = inlined_call_operand.hbm [shape: bf16[64,192], index: 1, kind: input, shape index: {}]
  %s2 = inlined_call_operand.hbm [shape: bf16[64,192], index: 2, kind: input, shape index: {}]
  %s3 = inlined_call_operand.vmem [shape: f32[1,192], index: 3, kind: input, shape index: {}]
  %s4 = inlined_call_operand.hbm [shape: bf16[192,128], index: 4, kind: input, shape index: {}]
  %s5 = inlined_call_operand.vmem [shape: f32[1,16], index: 5, kind: input, shape index: {}]
  %s6 = inlined_call_operand.hbm [shape: f32[2,16,256], index: 6, kind: output, shape index: {}]
  %s7 = sld [smem:[#allocation0]]
  $region77: #{tpu_custom_call.1} parent=0
    _
  %s9 = ssub.s32 1, %s7
  %s10 = scalar_select 0, %s9, %s7
  $region1: #{tpu_custom_call.1} parent=0
    #allocation4 [shape = 'u8[8192]{0}', space=vmem, size = 0x2000, scoped, tag = 'input window, operand 0']
    #allocation5 [shape = 's32[2]{0}', space=sflag, size = 0x8, scoped, tag = 'scoped memory for tpu_custom_call.1']
    #allocation6 [shape = 's32[2]{0}', space=sflag, size = 0x8, scoped, tag = 'scoped memory for tpu_custom_call.1']
    #allocation7 [shape = 'u8[32768]{0}', space=vmem, size = 0x8000, scoped, tag = 'input window, operand 1, single buffered']
    #allocation8 [shape = 's32[1]{0}', space=sflag, size = 0x4, scoped, tag = 'scoped memory for tpu_custom_call.1']
    #allocation9 [shape = 'u8[32768]{0}', space=vmem, size = 0x8000, scoped, tag = 'input window, operand 2, single buffered']
    #allocation10 [shape = 'u8[49152]{0}', space=vmem, size = 0xc000, scoped, tag = 'input window, operand 4, single buffered']
    #allocation11 [shape = 's32[1]{0}', space=sflag, size = 0x4, scoped, tag = 'scoped memory for tpu_custom_call.1']
    #allocation12 [shape = 'u8[16384]{0}', space=vmem, size = 0x4000, scoped, tag = 'output window, operand 0']
    %11 = vsyncpa [#allocation5], 0
    %s12 = scalar_lea.sflag [#allocation5], 1
    %13 = vsyncpa %s12, 0
    %14 = vsyncpa [#allocation8], 0
    %15 = vsyncpa [#allocation11], 0
    %16 = vsyncpa [#allocation6], 0
    %s17 = scalar_lea.sflag [#allocation6], 1
    %18 = vsyncpa %s17, 0
    loop: start=0, step=1, limit=6
    $region2: #{tpu_custom_call.1} parent=1 // loop_pre_header
      _
    $region3: #{tpu_custom_call.1} parent=1 // loop_header
      %s20 = sphi 0, %s24
      %p21 = scmp.ge.s32.totalorder %s20, 6
      %s27 = sphi 0, %s39
      %s28 = sphi 0, %s35
      %s29 = sphi 0, %s27
      %s30 = sphi 0, %s28
      %s31 = sphi 0, %s29
      %s32 = sphi 0, %s30
      %s42 = sphi 0, %s44
      %s45 = sphi 0, %s42
      %s46 = sphi 0, %s45
      %s62 = sphi 0, %s46
      %s66 = sphi 0, %s66
      %s68 = sphi 0, %s66
      %s69 = sphi 0, %s68
      %s83 = sphi 0, %s69
      %s87 = sphi 0, %s87
      %s89 = sphi 0, %s87
      %s90 = sphi 0, %s89
      %s104 = sphi 0, %s90
      %s108 = sphi 0, %s108
      %s110 = sphi 0, %s108
      %s111 = sphi 0, %s110
      %s125 = sphi 0, %s111
      %s129 = sphi 0, %s129
      %s131 = sphi 0, %s129
      %s132 = sphi 0, %s131
      %s146 = sphi 0, %s132
      %s150 = sphi 0, %s150
      %s152 = sphi 0, %s150
      %s153 = sphi 0, %s152
      %s167 = sphi 0, %s153
      %s175 = sphi 0, %s177
      %s178 = sphi 0, %s175
      %s179 = sphi 0, %s178
      %s195 = sphi 0, %s179
    $region4: #{tpu_custom_call.1} parent=1 // loop_header_branch
      %23 = sbr.rel (%p21) target = $region8
    $region5: #{tpu_custom_call.1} parent=1 // loop_body
      %s25 = ssub.s32 %s20, 1
      %s26 = ssub.s32 %s20, 2
      %s33 = sadd.s32 1, %s28
      %p34 = scmp.ge.s32.totalorder %s33, 2
      %s35 = scalar_select %p34, 0, %s33
      %s36 = sadd.s32 1, %s27
      %s37 = scalar_select %p34, %s36, %s27
      %p38 = scmp.ge.s32.totalorder %s37, 2
      %s39 = scalar_select %p38, 0, %s37
      %s40 = ssub.s32 %s27, %s39
      %p41 = scmp.eq.s32.totalorder %s40, 0
      %s43 = sadd.s32 %s42, 1
      %s44 = scalar_select %p41, %s42, %s43
      %p47 = pneg %p41
      %p48 = scmp.eq.s32.totalorder %s20, 3
      %p49 = por %p47, %p48
      %p50 = scmp.ne.s32.totalorder %s42, %s45
      %p51 = scmp.eq.s32.totalorder %s20, 0
      %p52 = por %p50, %p51
      %p53 = scmp.ne.s32.totalorder %s42, %s45
      %p54 = scmp.eq.s32.totalorder %s25, 3
      %p55 = por %p53, %p54
      %p56 = scmp.ne.s32.totalorder %s45, %s46
      %p57 = scmp.eq.s32.totalorder %s25, 0
      %p58 = por %p56, %p57
      %p59 = scmp.ne.s32.totalorder %s45, %s46
      %p60 = scmp.eq.s32.totalorder %s26, 3
      %p61 = por %p59, %p60
      %p63 = scmp.ne.s32.totalorder %s46, %s62
      %p64 = scmp.eq.s32.totalorder %s26, 0
      %p65 = por %p63, %p64
      %s67 = sadd.s32 %s66, 1
      %p70 = scmp.eq.s32.totalorder %s20, 3
      %p71 = scmp.ne.s32.totalorder %s66, %s68
      %p72 = scmp.eq.s32.totalorder %s20, 0
      %p73 = por %p71, %p72
      %p74 = scmp.ne.s32.totalorder %s66, %s68
      %p75 = scmp.eq.s32.totalorder %s25, 3
      %p76 = por %p74, %p75
      %p77 = scmp.ne.s32.totalorder %s68, %s69
      %p78 = scmp.eq.s32.totalorder %s25, 0
      %p79 = por %p77, %p78
      %p80 = scmp.ne.s32.totalorder %s68, %s69
      %p81 = scmp.eq.s32.totalorder %s26, 3
      %p82 = por %p80, %p81
      %p84 = scmp.ne.s32.totalorder %s69, %s83
      %p85 = scmp.eq.s32.totalorder %s26, 0
      %p86 = por %p84, %p85
      %s88 = sadd.s32 %s87, 1
      %p91 = scmp.eq.s32.totalorder %s20, 3
      %p92 = scmp.ne.s32.totalorder %s87, %s89
      %p93 = scmp.eq.s32.totalorder %s20, 0
      %p94 = por %p92, %p93
      %p95 = scmp.ne.s32.totalorder %s87, %s89
      %p96 = scmp.eq.s32.totalorder %s25, 3
      %p97 = por %p95, %p96
      %p98 = scmp.ne.s32.totalorder %s89, %s90
      %p99 = scmp.eq.s32.totalorder %s25, 0
      %p100 = por %p98, %p99
      %p101 = scmp.ne.s32.totalorder %s89, %s90
      %p102 = scmp.eq.s32.totalorder %s26, 3
      %p103 = por %p101, %p102
      %p105 = scmp.ne.s32.totalorder %s90, %s104
      %p106 = scmp.eq.s32.totalorder %s26, 0
      %p107 = por %p105, %p106
      %s109 = sadd.s32 %s108, 1
      %p112 = scmp.eq.s32.totalorder %s20, 3
      %p113 = scmp.ne.s32.totalorder %s108, %s110
      %p114 = scmp.eq.s32.totalorder %s20, 0
      %p115 = por %p113, %p114
      %p116 = scmp.ne.s32.totalorder %s108, %s110
      %p117 = scmp.eq.s32.totalorder %s25, 3
      %p118 = por %p116, %p117
      %p119 = scmp.ne.s32.totalorder %s110, %s111
      %p120 = scmp.eq.s32.totalorder %s25, 0
      %p121 = por %p119, %p120
      %p122 = scmp.ne.s32.totalorder %s110, %s111
      %p123 = scmp.eq.s32.totalorder %s26, 3
      %p124 = por %p122, %p123
      %p126 = scmp.ne.s32.totalorder %s111, %s125
      %p127 = scmp.eq.s32.totalorder %s26, 0
      %p128 = por %p126, %p127
      %s130 = sadd.s32 %s129, 1
      %p133 = scmp.eq.s32.totalorder %s20, 3
      %p134 = scmp.ne.s32.totalorder %s129, %s131
      %p135 = scmp.eq.s32.totalorder %s20, 0
      %p136 = por %p134, %p135
      %p137 = scmp.ne.s32.totalorder %s129, %s131
      %p138 = scmp.eq.s32.totalorder %s25, 3
      %p139 = por %p137, %p138
      %p140 = scmp.ne.s32.totalorder %s131, %s132
      %p141 = scmp.eq.s32.totalorder %s25, 0
      %p142 = por %p140, %p141
      %p143 = scmp.ne.s32.totalorder %s131, %s132
      %p144 = scmp.eq.s32.totalorder %s26, 3
      %p145 = por %p143, %p144
      %p147 = scmp.ne.s32.totalorder %s132, %s146
      %p148 = scmp.eq.s32.totalorder %s26, 0
      %p149 = por %p147, %p148
      %s151 = sadd.s32 %s150, 1
      %p154 = scmp.eq.s32.totalorder %s20, 3
      %p155 = scmp.ne.s32.totalorder %s150, %s152
      %p156 = scmp.eq.s32.totalorder %s20, 0
      %p157 = por %p155, %p156
      %p158 = scmp.ne.s32.totalorder %s150, %s152
      %p159 = scmp.eq.s32.totalorder %s25, 3
      %p160 = por %p158, %p159
      %p161 = scmp.ne.s32.totalorder %s152, %s153
      %p162 = scmp.eq.s32.totalorder %s25, 0
      %p163 = por %p161, %p162
      %p164 = scmp.ne.s32.totalorder %s152, %s153
      %p165 = scmp.eq.s32.totalorder %s26, 3
      %p166 = por %p164, %p165
      %p168 = scmp.ne.s32.totalorder %s153, %s167
      %p169 = scmp.eq.s32.totalorder %s26, 0
      %p170 = por %p168, %p169
      %s171 = ssub.s32 %s27, %s39
      %s172 = ssub.s32 %s28, %s35
      %s173 = sor.u32 %s171, %s172
      %p174 = scmp.eq.s32.totalorder %s173, 0
      %s176 = sadd.s32 %s175, 1
      %s177 = scalar_select %p174, %s175, %s176
      %p180 = pneg %p174
      %p181 = scmp.eq.s32.totalorder %s20, 3
      %p182 = por %p180, %p181
      %p183 = scmp.ne.s32.totalorder %s175, %s178
      %p184 = scmp.eq.s32.totalorder %s20, 0
      %p185 = por %p183, %p184
      %p186 = scmp.ne.s32.totalorder %s175, %s178
      %p187 = scmp.eq.s32.totalorder %s25, 3
      %p188 = por %p186, %p187
      %p189 = scmp.ne.s32.totalorder %s178, %s179
      %p190 = scmp.eq.s32.totalorder %s25, 0
      %p191 = por %p189, %p190
      %p192 = scmp.ne.s32.totalorder %s178, %s179
      %p193 = scmp.eq.s32.totalorder %s26, 3
      %p194 = por %p192, %p193
      %p196 = scmp.ne.s32.totalorder %s179, %s195
      %p197 = scmp.eq.s32.totalorder %s26, 0
      %p198 = por %p196, %p197
      %p199 = scmp.le.s32.totalorder 1, %s20
      %p200 = scmp.lt.s32.totalorder %s20, 5
      %p201 = pnand %p199, %p200
      %p202 = pneg %p201
      // Predicated region
      $region9: #{tpu_custom_call.1} parent=5 // pred_check
        _
      $region10: #{tpu_custom_call.1} parent=5 // pred_check_branch
        %204 = sbr.rel (%p201) target = $region12
      $region11: #{tpu_custom_call.1} parent=5 // pred_region
        %s205 = ssub.s32 %s20, 1
        // Predicated region
        $region13: #{tpu_custom_call.1} parent=11 // pred_check
          %p206 = pneg %p79
        $region14: #{tpu_custom_call.1} parent=11 // pred_check_branch
          %208 = sbr.rel (%p206) target = $region16
        $region15: #{tpu_custom_call.1} parent=11 // pred_region
          %s210 = ssub.s32 1024, 1024
          %211 = vsyncadd [#allocation8], %s210
          %s212 = sshll.u32 [#allocation7], 4
          %s213 = int_to_ptr.vmem [resolvable:$true] %s212
          %218 = dma.hbm_to_vmem [thread:$0]  %s1, 1024, %s213, [#allocation8], 128, 128, 8
        $region16: #{tpu_custom_call.1} parent=11 // pred_fallthru
          _
        // Predicated region
        $region17: #{tpu_custom_call.1} parent=11 // pred_check
          %p219 = pneg %p100
        $region18: #{tpu_custom_call.1} parent=11 // pred_check_branch
          %221 = sbr.rel (%p219) target = $region20
        $region19: #{tpu_custom_call.1} parent=11 // pred_region
          %s223 = ssub.s32 1024, 1024
          %224 = vsyncadd [#allocation8], %s223
          %s225 = sshll.u32 [#allocation9], 4
          %s226 = int_to_ptr.vmem [resolvable:$true] %s225
          %231 = dma.hbm_to_vmem [thread:$0]  %s2, 1024, %s226, [#allocation8], 128, 128, 8
        $region20: #{tpu_custom_call.1} parent=11 // pred_fallthru
          _
        // Predicated region
        $region21: #{tpu_custom_call.1} parent=11 // pred_check
          %p232 = pneg %p121
        $region22: #{tpu_custom_call.1} parent=11 // pred_check_branch
          %234 = sbr.rel (%p232) target = $region24
        $region23: #{tpu_custom_call.1} parent=11 // pred_region
          _
        $region24: #{tpu_custom_call.1} parent=11 // pred_fallthru
          _
        // Predicated region
        $region25: #{tpu_custom_call.1} parent=11 // pred_check
          %p235 = pneg %p142
        $region26: #{tpu_custom_call.1} parent=11 // pred_check_branch
          %237 = sbr.rel (%p235) target = $region28
        $region27: #{tpu_custom_call.1} parent=11 // pred_region
          %s239 = ssub.s32 1536, 1536
          %240 = vsyncadd [#allocation11], %s239
          %s241 = sshll.u32 [#allocation10], 4
          %s242 = int_to_ptr.vmem [resolvable:$true] %s241
          %247 = dma.hbm_to_vmem [thread:$0]  %s4, 1536, %s242, [#allocation11], 64, 64, 4
        $region28: #{tpu_custom_call.1} parent=11 // pred_fallthru
          _
        // Predicated region
        $region29: #{tpu_custom_call.1} parent=11 // pred_check
          %p248 = pneg %p163
        $region30: #{tpu_custom_call.1} parent=11 // pred_check_branch
          %250 = sbr.rel (%p248) target = $region32
        $region31: #{tpu_custom_call.1} parent=11 // pred_region
          _
        $region32: #{tpu_custom_call.1} parent=11 // pred_fallthru
          _
      $region12: #{tpu_custom_call.1} parent=5 // pred_fallthru
        _
      %p251 = scmp.lt.s32.totalorder %s20, 4
      // Predicated region
      $region33: #{tpu_custom_call.1} parent=5 // pred_check
        %p252 = pneg %p251
      $region34: #{tpu_custom_call.1} parent=5 // pred_check_branch
        %254 = sbr.rel (%p252) target = $region36
      $region35: #{tpu_custom_call.1} parent=5 // pred_region
        // Predicated region
        $region37: #{tpu_custom_call.1} parent=35 // pred_check
          %p255 = pneg %p52
        $region38: #{tpu_custom_call.1} parent=35 // pred_check_branch
          %257 = sbr.rel (%p255) target = $region40
        $region39: #{tpu_custom_call.1} parent=35 // pred_region
          %s258 = sand.u32 %s42, 1
          %s259 = scalar_lea.sflag [#allocation5], %s258
          %s260 = sand.u32 %s42, 1
          %s261 = smul.addr %s260, 8
          %s262 = scalar_lea.vmem [#allocation4], %s261
          %s264 = ssub.s32 128, 128
          %265 = vsyncadd %s259, %s264
          %s266 = smul.addr %s27, 2
          %s267 = smul.addr %s266, 64
          %s268 = scalar_lea.hbm %s0, %s267
          %s269 = sshll.u32 %s262, 4
          %s270 = int_to_ptr.vmem [resolvable:$true] %s269
          %275 = dma.hbm_to_vmem [thread:$0]  %s268, 128, %s270, %s259, 64, 64, 4
        $region40: #{tpu_custom_call.1} parent=35 // pred_fallthru
          _
      $region36: #{tpu_custom_call.1} parent=5 // pred_fallthru
        _
      %p276 = scmp.le.s32.totalorder 1, %s20
      %p277 = scmp.lt.s32.totalorder %s20, 5
      %p278 = pnand %p276, %p277
      %p279 = pneg %p278
      // Predicated region
      $region41: #{tpu_custom_call.1} parent=5 // pred_check
        _
      $region42: #{tpu_custom_call.1} parent=5 // pred_check_branch
        %281 = sbr.rel (%p278) target = $region44
      $region43: #{tpu_custom_call.1} parent=5 // pred_region
        %s282 = ssub.s32 %s20, 1
        %s283 = sand.u32 %s45, 1
        %s284 = scalar_lea.sflag [#allocation5], %s283
        %s285 = sand.u32 %s45, 1
        %s286 = smul.addr %s285, 8
        %s287 = scalar_lea.vmem [#allocation4], %s286
        // Predicated region
        $region45: #{tpu_custom_call.1} parent=43 // pred_check
          %p288 = pneg %p58
        $region46: #{tpu_custom_call.1} parent=43 // pred_check_branch
          %290 = sbr.rel (%p288) target = $region48
        $region47: #{tpu_custom_call.1} parent=43 // pred_region
          %291 = dma.done %s284, 128
        $region48: #{tpu_custom_call.1} parent=43 // pred_fallthru
          _
        // Predicated region
        $region49: #{tpu_custom_call.1} parent=43 // pred_check
          %p292 = pneg %p79
        $region50: #{tpu_custom_call.1} parent=43 // pred_check_branch
          %294 = sbr.rel (%p292) target = $region52
        $region51: #{tpu_custom_call.1} parent=43 // pred_region
          %295 = dma.done [#allocation8], 1024
        $region52: #{tpu_custom_call.1} parent=43 // pred_fallthru
          _
        // Predicated region
        $region53: #{tpu_custom_call.1} parent=43 // pred_check
          %p296 = pneg %p100
        $region54: #{tpu_custom_call.1} parent=43 // pred_check_branch
          %298 = sbr.rel (%p296) target = $region56
        $region55: #{tpu_custom_call.1} parent=43 // pred_region
          %299 = dma.done [#allocation8], 1024
        $region56: #{tpu_custom_call.1} parent=43 // pred_fallthru
          _
        // Predicated region
        $region57: #{tpu_custom_call.1} parent=43 // pred_check
          %p300 = pneg %p142
        $region58: #{tpu_custom_call.1} parent=43 // pred_check_branch
          %302 = sbr.rel (%p300) target = $region60
        $region59: #{tpu_custom_call.1} parent=43 // pred_region
          %303 = dma.done [#allocation11], 1536
        $region60: #{tpu_custom_call.1} parent=43 // pred_fallthru
          _
        %s304 = sand.u32 %s45, 1
        %s305 = scalar_lea.sflag [#allocation5], %s304
        %s306 = sand.u32 %s45, 1
        %s307 = smul.addr %s306, 8
        %s308 = scalar_lea.vmem [#allocation4], %s307
        %p309 = pneg %p58
        %p310 = pneg %p55
        %p311 = pneg %p79
        %p312 = pneg %p76
        %p313 = pneg %p100
        %p314 = pneg %p97
        %p315 = pneg %p121
        %p316 = pneg %p118
        %p317 = pneg %p142
        %p318 = pneg %p139
        %p319 = pneg %p163
        %p320 = pneg %p160
        %p321 = pneg %p191
        %p322 = pneg %p188
        %s323 = sand.u32 %s178, 1
        %s324 = scalar_lea.sflag [#allocation6], %s323
        %s325 = sand.u32 %s178, 1
        %s326 = smul.addr %s325, 16
        %s327 = scalar_lea.vmem [#allocation12], %s326
        %p329 = scmp.eq.s32.totalorder %s30, 0
        // Predicated region
        $region61: #{tpu_custom_call.1} parent=43 // pred_check
          %p330 = pneg %p329
        $region62: #{tpu_custom_call.1} parent=43 // pred_check_branch
          %332 = sbr.rel (%p330) target = $region64
        $region63: #{tpu_custom_call.1} parent=43 // pred_region
          %v333 = vld [vmem:[%s287] sm:$0xf]
          %v334 = vld [vmem:[%s287 + $0x4] sm:$0xf]
          %v335 = vld [vmem:[#allocation7] sm:$0xff]
          %v336 = vld [vmem:[#allocation7 + $0x8] sm:$0xff]
          %v337 = vld [vmem:[#allocation7 + $0x10] sm:$0xff]
          %v338 = vld [vmem:[#allocation7 + $0x18] sm:$0xff]
          %v339 = vld [vmem:[#allocation7 + $0x20] sm:$0xff]
          %v340 = vld [vmem:[#allocation7 + $0x28] sm:$0xff]
          %v341 = vld [vmem:[#allocation7 + $0x30] sm:$0xff]
          %v342 = vld [vmem:[#allocation7 + $0x38] sm:$0xff]
          %v343 = vld [vmem:[%s3] sm:$0x3]
          %v345 = vlaneseq
          %v346 = vshrl.u32 %v345, 7
          %v347 = vsub.s32 0, %v346
          %v348 = vrot.slane %v343, %v347
          %v349 = vlaneseq
          %v350 = vshrl.u32 %v349, 7
          %v351 = vsub.s32 1, %v350
          %v352 = vrot.slane %v343, %v351
          %v357 = vunpack.c.l.b16 %v333
          %v358 = vunpack.c.l.b16 %v334
          %v359 = vpack.c.b16 %v358, %v357
          %v368 = vunpack.c.l.b16 %v335
          %v369 = vunpack.c.h.b16 %v335
          %v370 = vunpack.c.l.b16 %v336
          %v371 = vunpack.c.h.b16 %v336
          %v372 = vunpack.c.l.b16 %v337
          %v373 = vunpack.c.h.b16 %v337
          %v374 = vunpack.c.l.b16 %v338
          %v375 = vunpack.c.h.b16 %v338
          %v376 = vunpack.c.l.b16 %v339
          %v377 = vunpack.c.h.b16 %v339
          %v378 = vunpack.c.l.b16 %v340
          %v379 = vunpack.c.h.b16 %v340
          %v380 = vunpack.c.l.b16 %v341
          %v381 = vunpack.c.h.b16 %v341
          %v382 = vunpack.c.l.b16 %v342
          %v383 = vunpack.c.h.b16 %v342
          %v384 = vpack.c.b16 %v370, %v368
          %v385 = vpack.c.b16 %v371, %v369
          %v386 = vpack.c.b16 %v374, %v372
          %v387 = vpack.c.b16 %v375, %v373
          %v388 = vpack.c.b16 %v378, %v376
          %v389 = vpack.c.b16 %v379, %v377
          %v390 = vpack.c.b16 %v382, %v380
          %v391 = vpack.c.b16 %v383, %v381
          %vm400 = vcmask 523264
          %v402 = vsel %vm400, %v359, 0
          %404 = vmatprep.subr.bf16.mxu0 %v385
          %405 = vmatpush1.bf16.msra.mxu0 %v384
          %406 = vmatprep.subr.bf16.mxu0 %v387
          %407 = vmatpush1.bf16.msra.mxu0 %v386
          %408 = vmatprep.subr.bf16.mxu0 %v389
          %409 = vmatpush1.bf16.msra.mxu0 %v388
          %410 = vmatprep.subr.bf16.mxu0 %v391
          %411 = vmatpush1.bf16.msra.mxu0 %v390
          %412 = vmatprep.subr.bf16.mxu0 0
          %413 = vmatpush1.bf16.msra.mxu0 0
          %414 = vmatprep.subr.bf16.mxu0 0
          %415 = vmatpush1.bf16.msra.mxu0 0
          %416 = vmatprep.subr.bf16.mxu0 0
          %417 = vmatpush1.bf16.msra.mxu0 0
          %418 = vmatprep.subr.bf16.mxu0 0
          %419 = vmatpush1.bf16.msra.mxu0 0
          %420 = vmatprep.subr.bf16.mxu0 0
          %421 = vmatpush1.bf16.msra.mxu0 0
          %422 = vmatprep.subr.bf16.mxu0 0
          %423 = vmatpush1.bf16.msra.mxu0 0
          %424 = vmatprep.subr.bf16.mxu0 0
          %425 = vmatpush1.bf16.msra.mxu0 0
          %426 = vmatprep.subr.bf16.mxu0 0
          %427 = vmatpush1.bf16.msra.mxu0 0
          %428 = vmatprep.subr.bf16.mxu0 0
          %429 = vmatpush1.bf16.msra.mxu0 0
          %430 = vmatprep.subr.bf16.mxu0 0
          %431 = vmatpush1.bf16.msra.mxu0 0
          %432 = vmatprep.subr.bf16.mxu0 0
          %433 = vmatpush1.bf16.msra.mxu0 0
          %434 = vmatprep.subr.bf16.mxu0 0
          %435 = vmatpush1.bf16.msra.mxu0 0
          %436 = vmatprep.mubr.bf16.mxu0 0
          %437 = vmatmul.mubr.bf16.gmra.mrb[0].mxu0 %v402
          %v438 = vpop.f32.mrb[0].mxu0
          %v439 = vadd.f32 %v348, %v438
          %v440 = vpop.f32.mrb[0].mxu0
          %v441 = vadd.f32 %v352, %v440
          %v442 = vpop.f32.mrb[0].mxu0
          %v443 = vadd.f32 %v348, %v442
          %v444 = vpop.f32.mrb[0].mxu0
          %v445 = vadd.f32 %v352, %v444
          %446 = vdwg.mxu0
          %447 = vst [vmem:[#allocation2] sm:$0xff] %v439
          %448 = vst.msk [vmem:[#allocation2 + $0x8] sm:$0xff] %vm400, %v441
          %449 = vst [vmem:[#allocation2 + $0x10] sm:$0xff] %v443
          %450 = vst.msk [vmem:[#allocation2 + $0x18] sm:$0xff] %vm400, %v445
          %v451 = vld [vmem:[#allocation9] sm:$0xff]
          %v452 = vld [vmem:[#allocation9 + $0x8] sm:$0xff]
          %v453 = vld [vmem:[#allocation9 + $0x10] sm:$0xff]
          %v454 = vld [vmem:[#allocation9 + $0x18] sm:$0xff]
          %v455 = vld [vmem:[#allocation9 + $0x20] sm:$0xff]
          %v456 = vld [vmem:[#allocation9 + $0x28] sm:$0xff]
          %v457 = vld [vmem:[#allocation9 + $0x30] sm:$0xff]
          %v458 = vld [vmem:[#allocation9 + $0x38] sm:$0xff]
          %v467 = vunpack.c.l.b16 %v451
          %v468 = vunpack.c.h.b16 %v451
          %v469 = vunpack.c.l.b16 %v452
          %v470 = vunpack.c.h.b16 %v452
          %v471 = vunpack.c.l.b16 %v453
          %v472 = vunpack.c.h.b16 %v453
          %v473 = vunpack.c.l.b16 %v454
          %v474 = vunpack.c.h.b16 %v454
          %v475 = vunpack.c.l.b16 %v455
          %v476 = vunpack.c.h.b16 %v455
          %v477 = vunpack.c.l.b16 %v456
          %v478 = vunpack.c.h.b16 %v456
          %v479 = vunpack.c.l.b16 %v457
          %v480 = vunpack.c.h.b16 %v457
          %v481 = vunpack.c.l.b16 %v458
          %v482 = vunpack.c.h.b16 %v458
          %v483 = vpack.c.b16 %v469, %v467
          %v484 = vpack.c.b16 %v470, %v468
          %v485 = vpack.c.b16 %v473, %v471
          %v486 = vpack.c.b16 %v474, %v472
          %v487 = vpack.c.b16 %v477, %v475
          %v488 = vpack.c.b16 %v478, %v476
          %v489 = vpack.c.b16 %v481, %v479
          %v490 = vpack.c.b16 %v482, %v480
          %499 = vmatprep.subr.bf16.mxu0 %v484
          %500 = vmatpush1.bf16.msra.mxu0 %v483
          %501 = vmatprep.subr.bf16.mxu0 %v486
          %502 = vmatpush1.bf16.msra.mxu0 %v485
          %503 = vmatprep.subr.bf16.mxu0 %v488
          %504 = vmatpush1.bf16.msra.mxu0 %v487
          %505 = vmatprep.subr.bf16.mxu0 %v490
          %506 = vmatpush1.bf16.msra.mxu0 %v489
          %507 = vmatprep.subr.bf16.mxu0 0
          %508 = vmatpush1.bf16.msra.mxu0 0
          %509 = vmatprep.subr.bf16.mxu0 0
          %510 = vmatpush1.bf16.msra.mxu0 0
          %511 = vmatprep.subr.bf16.mxu0 0
          %512 = vmatpush1.bf16.msra.mxu0 0
          %513 = vmatprep.subr.bf16.mxu0 0
          %514 = vmatpush1.bf16.msra.mxu0 0
          %515 = vmatprep.subr.bf16.mxu0 0
          %516 = vmatpush1.bf16.msra.mxu0 0
          %517 = vmatprep.subr.bf16.mxu0 0
          %518 = vmatpush1.bf16.msra.mxu0 0
          %519 = vmatprep.subr.bf16.mxu0 0
          %520 = vmatpush1.bf16.msra.mxu0 0
          %521 = vmatprep.subr.bf16.mxu0 0
          %522 = vmatpush1.bf16.msra.mxu0 0
          %523 = vmatprep.subr.bf16.mxu0 0
          %524 = vmatpush1.bf16.msra.mxu0 0
          %525 = vmatprep.subr.bf16.mxu0 0
          %526 = vmatpush1.bf16.msra.mxu0 0
          %527 = vmatprep.subr.bf16.mxu0 0
          %528 = vmatpush1.bf16.msra.mxu0 0
          %529 = vmatprep.subr.bf16.mxu0 0
          %530 = vmatpush1.bf16.msra.mxu0 0
          %531 = vmatprep.mubr.bf16.mxu0 0
          %532 = vmatmul.mubr.bf16.gmra.mrb[0].mxu0 %v402
          %v533 = vpop.f32.mrb[0].mxu0
          %v534 = vadd.f32 0.0, %v533
          %v535 = vpop.f32.mrb[0].mxu0
          %v536 = vadd.f32 0.0, %v535
          %v537 = vpop.f32.mrb[0].mxu0
          %v538 = vadd.f32 0.0, %v537
          %v539 = vpop.f32.mrb[0].mxu0
          %v540 = vadd.f32 0.0, %v539
          %541 = vdwg.mxu0
          %542 = vst [vmem:[#allocation3] sm:$0xff] %v534
          %543 = vst.msk [vmem:[#allocation3 + $0x8] sm:$0xff] %vm400, %v536
          %544 = vst [vmem:[#allocation3 + $0x10] sm:$0xff] %v538
          %545 = vst.msk [vmem:[#allocation3 + $0x18] sm:$0xff] %vm400, %v540
        $region64: #{tpu_custom_call.1} parent=43 // pred_fallthru
          _
        %s546 = smul.u32 %s30, 8
        %s547 = sshra.s32 %s546, 3
        %s548 = sand.u32 %s546, 7
        %s549 = smul.u32 %s547, 2
        %s550 = smul.addr %s549, 8
        %s551 = scalar_lea.vmem [#allocation2], %s550
        %v552 = vld [vmem:[%s551] sm:$0xff]
        %v553 = vld [vmem:[%s551 + $0x8] sm:$0xff]
        %v556 = vcombine.low %v552, %v553
        %v557 = vcombine.high %v552, %v553
        %v559 = vunpack.c.l.s4 1966171168
        %v560 = vunpack.c.0.s8 %v559
        %v561 = vlaneseq
        %v562 = vshrl.u32 %v561, 7
        %v563 = vsub.s32 %v560, %v562
        %v564 = vrot.slane %v556, %v563
        %v566 = vunpack.c.l.s4 1966171168
        %v567 = vunpack.c.0.s8 %v566
        %v568 = vlaneseq
        %v569 = vshrl.u32 %v568, 7
        %v570 = vsub.s32 %v567, %v569
        %v571 = vrot.slane %v557, %v570
        %v572 = vcombine.high %v564, %v564
        %v573 = vcombine.high %v571, %v571
        %v575 = vunpack.c.l.s4 1966171168
        %v576 = vunpack.c.0.s8 %v575
        %v577 = vlaneseq
        %v578 = vshrl.u32 %v577, 7
        %v579 = vsub.s32 %v576, %v578
        %v580 = vrot.slane %v564, %v579
        %v582 = vunpack.c.l.s4 1966171168
        %v583 = vunpack.c.0.s8 %v582
        %v584 = vlaneseq
        %v585 = vshrl.u32 %v584, 7
        %v586 = vsub.s32 %v583, %v585
        %v587 = vrot.slane %v571, %v586
        %v589 = vunpack.c.l.s4 1966171168
        %v590 = vunpack.c.0.s8 %v589
        %v591 = vlaneseq
        %v592 = vshrl.u32 %v591, 7
        %v593 = vsub.s32 %v590, %v592
        %v594 = vrot.slane %v572, %v593
        %v596 = vunpack.c.l.s4 1966171168
        %v597 = vunpack.c.0.s8 %v596
        %v598 = vlaneseq
        %v599 = vshrl.u32 %v598, 7
        %v600 = vsub.s32 %v597, %v599
        %v601 = vrot.slane %v573, %v600
        %v602 = vcombine.high %v580, %v580
        %v603 = vcombine.high %v587, %v587
        %v604 = vcombine.high %v594, %v594
        %v605 = vcombine.high %v601, %v601
        %v606 = vld [vmem:[#allocation3] sm:$0xff]
        %v607 = vld [vmem:[#allocation3 + $0x8] sm:$0xff]
        %v608 = vld [vmem:[#allocation3 + $0x10] sm:$0xff]
        %v609 = vld [vmem:[#allocation3 + $0x18] sm:$0xff]
        %v610 = vlaneseq
        %v611 = vshrl.u32 %v610, 7
        %v612 = vsub.s32 0, %v611
        %v613 = vrot.slane %v580, %v612
        %v614 = vlaneseq
        %v615 = vshrl.u32 %v614, 7
        %v616 = vsub.s32 1, %v615
        %v617 = vrot.slane %v580, %v616
        %v618 = vlaneseq
        %v619 = vshrl.u32 %v618, 7
        %v620 = vsub.s32 0, %v619
        %v621 = vrot.slane %v594, %v620
        %v622 = vlaneseq
        %v623 = vshrl.u32 %v622, 7
        %v624 = vsub.s32 1, %v623
        %v625 = vrot.slane %v594, %v624
        %v626 = vlaneseq
        %v627 = vshrl.u32 %v626, 7
        %v628 = vsub.s32 0, %v627
        %v629 = vrot.slane %v602, %v628
        %v630 = vlaneseq
        %v631 = vshrl.u32 %v630, 7
        %v632 = vsub.s32 1, %v631
        %v633 = vrot.slane %v602, %v632
        %v634 = vlaneseq
        %v635 = vshrl.u32 %v634, 7
        %v636 = vsub.s32 0, %v635
        %v637 = vrot.slane %v604, %v636
        %v638 = vlaneseq
        %v639 = vshrl.u32 %v638, 7
        %v640 = vsub.s32 1, %v639
        %v641 = vrot.slane %v604, %v640
        %v642 = vlaneseq
        %v643 = vshrl.u32 %v642, 7
        %v644 = vsub.s32 0, %v643
        %v645 = vrot.slane %v587, %v644
        %v646 = vlaneseq
        %v647 = vshrl.u32 %v646, 7
        %v648 = vsub.s32 1, %v647
        %v649 = vrot.slane %v587, %v648
        %v650 = vlaneseq
        %v651 = vshrl.u32 %v650, 7
        %v652 = vsub.s32 0, %v651
        %v653 = vrot.slane %v601, %v652
        %v654 = vlaneseq
        %v655 = vshrl.u32 %v654, 7
        %v656 = vsub.s32 1, %v655
        %v657 = vrot.slane %v601, %v656
        %v658 = vlaneseq
        %v659 = vshrl.u32 %v658, 7
        %v660 = vsub.s32 0, %v659
        %v661 = vrot.slane %v603, %v660
        %v662 = vlaneseq
        %v663 = vshrl.u32 %v662, 7
        %v664 = vsub.s32 1, %v663
        %v665 = vrot.slane %v603, %v664
        %v666 = vlaneseq
        %v667 = vshrl.u32 %v666, 7
        %v668 = vsub.s32 0, %v667
        %v669 = vrot.slane %v605, %v668
        %v670 = vlaneseq
        %v671 = vshrl.u32 %v670, 7
        %v672 = vsub.s32 1, %v671
        %v673 = vrot.slane %v605, %v672
        %v690 = vadd.f32 %v613, %v606
        %v691 = vadd.f32 %v617, %v607
        %v692 = vadd.f32 %v613, %v608
        %v693 = vadd.f32 %v617, %v609
        %v694 = vadd.f32 %v621, %v606
        %v695 = vadd.f32 %v625, %v607
        %v696 = vadd.f32 %v621, %v608
        %v697 = vadd.f32 %v625, %v609
        %v698 = vadd.f32 %v629, %v606
        %v699 = vadd.f32 %v633, %v607
        %v700 = vadd.f32 %v629, %v608
        %v701 = vadd.f32 %v633, %v609
        %v702 = vadd.f32 %v637, %v606
        %v703 = vadd.f32 %v641, %v607
        %v704 = vadd.f32 %v637, %v608
        %v705 = vadd.f32 %v641, %v609
        %v706 = vadd.f32 %v645, %v606
        %v707 = vadd.f32 %v649, %v607
        %v708 = vadd.f32 %v645, %v608
        %v709 = vadd.f32 %v649, %v609
        %v710 = vadd.f32 %v653, %v606
        %v711 = vadd.f32 %v657, %v607
        %v712 = vadd.f32 %v653, %v608
        %v713 = vadd.f32 %v657, %v609
        %v714 = vadd.f32 %v661, %v606
        %v715 = vadd.f32 %v665, %v607
        %v716 = vadd.f32 %v661, %v608
        %v717 = vadd.f32 %v665, %v609
        %v718 = vadd.f32 %v669, %v606
        %v719 = vadd.f32 %v673, %v607
        %v720 = vadd.f32 %v669, %v608
        %v721 = vadd.f32 %v673, %v609
        %v722 = vmax.f32 %v690, 0.0
        %v723 = vmax.f32 %v691, 0.0
        %v724 = vmax.f32 %v692, 0.0
        %v725 = vmax.f32 %v693, 0.0
        %v726 = vmax.f32 %v694, 0.0
        %v727 = vmax.f32 %v695, 0.0
        %v728 = vmax.f32 %v696, 0.0
        %v729 = vmax.f32 %v697, 0.0
        %v730 = vmax.f32 %v698, 0.0
        %v731 = vmax.f32 %v699, 0.0
        %v732 = vmax.f32 %v700, 0.0
        %v733 = vmax.f32 %v701, 0.0
        %v734 = vmax.f32 %v702, 0.0
        %v735 = vmax.f32 %v703, 0.0
        %v736 = vmax.f32 %v704, 0.0
        %v737 = vmax.f32 %v705, 0.0
        %v738 = vmax.f32 %v706, 0.0
        %v739 = vmax.f32 %v707, 0.0
        %v740 = vmax.f32 %v708, 0.0
        %v741 = vmax.f32 %v709, 0.0
        %v742 = vmax.f32 %v710, 0.0
        %v743 = vmax.f32 %v711, 0.0
        %v744 = vmax.f32 %v712, 0.0
        %v745 = vmax.f32 %v713, 0.0
        %v746 = vmax.f32 %v714, 0.0
        %v747 = vmax.f32 %v715, 0.0
        %v748 = vmax.f32 %v716, 0.0
        %v749 = vmax.f32 %v717, 0.0
        %v750 = vmax.f32 %v718, 0.0
        %v751 = vmax.f32 %v719, 0.0
        %v752 = vmax.f32 %v720, 0.0
        %v753 = vmax.f32 %v721, 0.0
        %v754 = vpack.c.bf16 %v724, %v722
        %v755 = vpack.c.bf16 %v725, %v723
        %v756 = vpack.c.bf16 %v728, %v726
        %v757 = vpack.c.bf16 %v729, %v727
        %v758 = vpack.c.bf16 %v732, %v730
        %v759 = vpack.c.bf16 %v733, %v731
        %v760 = vpack.c.bf16 %v736, %v734
        %v761 = vpack.c.bf16 %v737, %v735
        %v762 = vpack.c.bf16 %v740, %v738
        %v763 = vpack.c.bf16 %v741, %v739
        %v764 = vpack.c.bf16 %v744, %v742
        %v765 = vpack.c.bf16 %v745, %v743
        %v766 = vpack.c.bf16 %v748, %v746
        %v767 = vpack.c.bf16 %v749, %v747
        %v768 = vpack.c.bf16 %v752, %v750
        %v769 = vpack.c.bf16 %v753, %v751
        %v770 = vld [vmem:[#allocation10] sm:$0xf]
        %v771 = vld [vmem:[#allocation10 + $0x4] sm:$0xf]
        %v772 = vld [vmem:[#allocation10 + $0x8] sm:$0xf]
        %v773 = vld [vmem:[#allocation10 + $0xc] sm:$0xf]
        %v774 = vld [vmem:[#allocation10 + $0x10] sm:$0xf]
        %v775 = vld [vmem:[#allocation10 + $0x14] sm:$0xf]
        %v776 = vld [vmem:[#allocation10 + $0x18] sm:$0xf]
        %v777 = vld [vmem:[#allocation10 + $0x1c] sm:$0xf]
        %v778 = vld [vmem:[#allocation10 + $0x20] sm:$0xf]
        %v779 = vld [vmem:[#allocation10 + $0x24] sm:$0xf]
        %v780 = vld [vmem:[#allocation10 + $0x28] sm:$0xf]
        %v781 = vld [vmem:[#allocation10 + $0x2c] sm:$0xf]
        %v782 = vld [vmem:[#allocation10 + $0x30] sm:$0xf]
        %v783 = vld [vmem:[#allocation10 + $0x34] sm:$0xf]
        %v784 = vld [vmem:[#allocation10 + $0x38] sm:$0xf]
        %v785 = vld [vmem:[#allocation10 + $0x3c] sm:$0xf]
        %v786 = vld [vmem:[#allocation10 + $0x40] sm:$0xf]
        %v787 = vld [vmem:[#allocation10 + $0x44] sm:$0xf]
        %v788 = vld [vmem:[#allocation10 + $0x48] sm:$0xf]
        %v789 = vld [vmem:[#allocation10 + $0x4c] sm:$0xf]
        %v790 = vld [vmem:[#allocation10 + $0x50] sm:$0xf]
        %v791 = vld [vmem:[#allocation10 + $0x54] sm:$0xf]
        %v792 = vld [vmem:[#allocation10 + $0x58] sm:$0xf]
        %v793 = vld [vmem:[#allocation10 + $0x5c] sm:$0xf]
        %v818 = vunpack.c.l.b16 %v770
        %v819 = vunpack.c.l.b16 %v771
        %v820 = vunpack.c.l.b16 %v772
        %v821 = vunpack.c.l.b16 %v773
        %v822 = vunpack.c.l.b16 %v774
        %v823 = vunpack.c.l.b16 %v775
        %v824 = vunpack.c.l.b16 %v776
        %v825 = vunpack.c.l.b16 %v777
        %v826 = vunpack.c.l.b16 %v778
        %v827 = vunpack.c.l.b16 %v779
        %v828 = vunpack.c.l.b16 %v780
        %v829 = vunpack.c.l.b16 %v781
        %v830 = vunpack.c.l.b16 %v782
        %v831 = vunpack.c.l.b16 %v783
        %v832 = vunpack.c.l.b16 %v784
        %v833 = vunpack.c.l.b16 %v785
        %v834 = vunpack.c.l.b16 %v786
        %v835 = vunpack.c.l.b16 %v787
        %v836 = vunpack.c.l.b16 %v788
        %v837 = vunpack.c.l.b16 %v789
        %v838 = vunpack.c.l.b16 %v790
        %v839 = vunpack.c.l.b16 %v791
        %v840 = vunpack.c.l.b16 %v792
        %v841 = vunpack.c.l.b16 %v793
        %v842 = vpack.c.b16 %v819, %v818
        %v843 = vpack.c.b16 %v821, %v820
        %v844 = vpack.c.b16 %v823, %v822
        %v845 = vpack.c.b16 %v825, %v824
        %v846 = vpack.c.b16 %v827, %v826
        %v847 = vpack.c.b16 %v829, %v828
        %v848 = vpack.c.b16 %v831, %v830
        %v849 = vpack.c.b16 %v833, %v832
        %v850 = vpack.c.b16 %v835, %v834
        %v851 = vpack.c.b16 %v837, %v836
        %v852 = vpack.c.b16 %v839, %v838
        %v853 = vpack.c.b16 %v841, %v840
        %vm866 = vcmask 523264
        %v868 = vsel %vm866, %v755, 0
        %v871 = vsel %vm866, %v757, 0
        %v874 = vsel %vm866, %v759, 0
        %v877 = vsel %vm866, %v761, 0
        %v880 = vsel %vm866, %v763, 0
        %v883 = vsel %vm866, %v765, 0
        %v886 = vsel %vm866, %v767, 0
        %v889 = vsel %vm866, %v769, 0
        %891 = vmatprep.subr.bf16.mxu0 0
        %892 = vmatpush1.bf16.msra.mxu0 %v842
        %893 = vmatprep.subr.bf16.mxu0 0
        %894 = vmatpush1.bf16.msra.mxu0 %v843
        %895 = vmatprep.subr.bf16.mxu0 0
        %896 = vmatpush1.bf16.msra.mxu0 %v844
        %897 = vmatprep.subr.bf16.mxu0 0
        %898 = vmatpush1.bf16.msra.mxu0 %v845
        %899 = vmatprep.subr.bf16.mxu0 0
        %900 = vmatpush1.bf16.msra.mxu0 %v846
        %901 = vmatprep.subr.bf16.mxu0 0
        %902 = vmatpush1.bf16.msra.mxu0 %v847
        %903 = vmatprep.subr.bf16.mxu0 0
        %904 = vmatpush1.bf16.msra.mxu0 %v848
        %905 = vmatprep.subr.bf16.mxu0 0
        %906 = vmatpush1.bf16.msra.mxu0 %v849
        %907 = vmatprep.subr.bf16.mxu0 0
        %908 = vmatpush1.bf16.msra.mxu0 %v850
        %909 = vmatprep.subr.bf16.mxu0 0
        %910 = vmatpush1.bf16.msra.mxu0 %v851
        %911 = vmatprep.subr.bf16.mxu0 0
        %912 = vmatpush1.bf16.msra.mxu0 %v852
        %913 = vmatprep.subr.bf16.mxu0 0
        %914 = vmatpush1.bf16.msra.mxu0 %v853
        %915 = vmatprep.subr.bf16.mxu0 0
        %916 = vmatpush1.bf16.msra.mxu0 0
        %917 = vmatprep.subr.bf16.mxu0 0
        %918 = vmatpush1.bf16.msra.mxu0 0
        %919 = vmatprep.subr.bf16.mxu0 0
        %920 = vmatpush1.bf16.msra.mxu0 0
        %921 = vmatprep.subr.bf16.mxu0 0
        %922 = vmatpush1.bf16.msra.mxu0 0
        %923 = vmatprep.mubr.bf16.mxu0 %v868
        %924 = vmatmul.mubr.bf16.gmra.mrb[0].mxu0 %v754
        %v925 = vpop.f32.mrb[0].mxu0
        %v926 = vadd.f32 0.0, %v925
        %v927 = vpop.f32.mrb[0].mxu0
        %v928 = vpop.f32.mrb[0].mxu0
        %v929 = vadd.f32 0.0, %v928
        %v930 = vpop.f32.mrb[0].mxu0
        %931 = vmatprep.mubr.bf16.mxu0 %v871
        %932 = vmatmul.mubr.bf16.gmra.mrb[0].mxu0 %v756
        %v933 = vpop.f32.mrb[0].mxu0
        %v934 = vadd.f32 0.0, %v933
        %v935 = vpop.f32.mrb[0].mxu0
        %v936 = vpop.f32.mrb[0].mxu0
        %v937 = vadd.f32 0.0, %v936
        %v938 = vpop.f32.mrb[0].mxu0
        %939 = vmatprep.mubr.bf16.mxu0 %v874
        %940 = vmatmul.mubr.bf16.gmra.mrb[0].mxu0 %v758
        %v941 = vpop.f32.mrb[0].mxu0
        %v942 = vadd.f32 0.0, %v941
        %v943 = vpop.f32.mrb[0].mxu0
        %v944 = vpop.f32.mrb[0].mxu0
        %v945 = vadd.f32 0.0, %v944
        %v946 = vpop.f32.mrb[0].mxu0
        %947 = vmatprep.mubr.bf16.mxu0 %v877
        %948 = vmatmul.mubr.bf16.gmra.mrb[0].mxu0 %v760
        %v949 = vpop.f32.mrb[0].mxu0
        %v950 = vadd.f32 0.0, %v949
        %v951 = vpop.f32.mrb[0].mxu0
        %v952 = vpop.f32.mrb[0].mxu0
        %v953 = vadd.f32 0.0, %v952
        %v954 = vpop.f32.mrb[0].mxu0
        %955 = vmatprep.mubr.bf16.mxu0 %v880
        %956 = vmatmul.mubr.bf16.gmra.mrb[0].mxu0 %v762
        %v957 = vpop.f32.mrb[0].mxu0
        %v958 = vadd.f32 0.0, %v957
        %v959 = vpop.f32.mrb[0].mxu0
        %v960 = vpop.f32.mrb[0].mxu0
        %v961 = vadd.f32 0.0, %v960
        %v962 = vpop.f32.mrb[0].mxu0
        %963 = vmatprep.mubr.bf16.mxu0 %v883
        %964 = vmatmul.mubr.bf16.gmra.mrb[0].mxu0 %v764
        %v965 = vpop.f32.mrb[0].mxu0
        %v966 = vadd.f32 0.0, %v965
        %v967 = vpop.f32.mrb[0].mxu0
        %v968 = vpop.f32.mrb[0].mxu0
        %v969 = vadd.f32 0.0, %v968
        %v970 = vpop.f32.mrb[0].mxu0
        %971 = vmatprep.mubr.bf16.mxu0 %v886
        %972 = vmatmul.mubr.bf16.gmra.mrb[0].mxu0 %v766
        %v973 = vpop.f32.mrb[0].mxu0
        %v974 = vadd.f32 0.0, %v973
        %v975 = vpop.f32.mrb[0].mxu0
        %v976 = vpop.f32.mrb[0].mxu0
        %v977 = vadd.f32 0.0, %v976
        %v978 = vpop.f32.mrb[0].mxu0
        %979 = vmatprep.mubr.bf16.mxu0 %v889
        %980 = vmatmul.mubr.bf16.gmra.mrb[0].mxu0 %v768
        %v981 = vpop.f32.mrb[0].mxu0
        %v982 = vadd.f32 0.0, %v981
        %v983 = vpop.f32.mrb[0].mxu0
        %v984 = vpop.f32.mrb[0].mxu0
        %v985 = vadd.f32 0.0, %v984
        %v986 = vpop.f32.mrb[0].mxu0
        %987 = vdwg.mxu0
        %v988 = vld [vmem:[%s5] sm:$0x1]
        %v990 = vlaneseq
        %v991 = vshrl.u32 %v990, 7
        %v992 = vsub.s32 0, %v991
        %v993 = vrot.slane %v988, %v992
        %v995 = vadd.f32 %v926, %v993
        %v996 = vadd.f32 %v929, %v993
        %v997 = vadd.f32 %v934, %v993
        %v998 = vadd.f32 %v937, %v993
        %v999 = vadd.f32 %v942, %v993
        %v1000 = vadd.f32 %v945, %v993
        %v1001 = vadd.f32 %v950, %v993
        %v1002 = vadd.f32 %v953, %v993
        %v1003 = vadd.f32 %v958, %v993
        %v1004 = vadd.f32 %v961, %v993
        %v1005 = vadd.f32 %v966, %v993
        %v1006 = vadd.f32 %v969, %v993
        %v1007 = vadd.f32 %v974, %v993
        %v1008 = vadd.f32 %v977, %v993
        %v1009 = vadd.f32 %v982, %v993
        %v1010 = vadd.f32 %v985, %v993
        %1011 = vxpose.xlu0.b32.start [1/16] %v995, 128
        %1012 = vxpose.xlu0.b32.cont [2/16] %v996, 128
        %1013 = vxpose.xlu0.b32.cont [3/16] %v997, 128
        %1014 = vxpose.xlu0.b32.cont [4/16] %v998, 128
        %1015 = vxpose.xlu0.b32.cont [5/16] %v999, 128
        %1016 = vxpose.xlu0.b32.cont [6/16] %v1000, 128
        %1017 = vxpose.xlu0.b32.cont [7/16] %v1001, 128
        %1018 = vxpose.xlu0.b32.cont [8/16] %v1002, 128
        %1019 = vxpose.xlu0.b32.cont [9/16] %v1003, 128
        %1020 = vxpose.xlu0.b32.cont [10/16] %v1004, 128
        %1021 = vxpose.xlu0.b32.cont [11/16] %v1005, 128
        %1022 = vxpose.xlu0.b32.cont [12/16] %v1006, 128
        %1023 = vxpose.xlu0.b32.cont [13/16] %v1007, 128
        %1024 = vxpose.xlu0.b32.cont [14/16] %v1008, 128
        %1025 = vxpose.xlu0.b32.cont [15/16] %v1009, 128
        %1026 = vxpose.xlu0.b32.end [16/16] %v1010, 128
        %v1027 = vpop.trf.xlu0
        %v1028 = vpop.trf.xlu0
        %v1029 = vpop.trf.xlu0
        %v1030 = vpop.trf.xlu0
        %v1031 = vpop.trf.xlu0
        %v1032 = vpop.trf.xlu0
        %v1033 = vpop.trf.xlu0
        %v1034 = vpop.trf.xlu0
        %v1035 = vpop.trf.xlu0
        %v1036 = vpop.trf.xlu0
        %v1037 = vpop.trf.xlu0
        %v1038 = vpop.trf.xlu0
        %v1039 = vpop.trf.xlu0
        %v1040 = vpop.trf.xlu0
        %v1041 = vpop.trf.xlu0
        %v1042 = vpop.trf.xlu0
        %1043 = vst [vmem:[%s327] sm:$0xff] %v1027
        %1044 = vst [vmem:[%s327 + $0x8] sm:$0xff] %v1028
        %s1045 = sand.u32 %s178, 1
        %s1046 = scalar_lea.sflag [#allocation6], %s1045
        %s1047 = sand.u32 %s178, 1
        %s1048 = smul.addr %s1047, 16
        %s1049 = scalar_lea.vmem [#allocation12], %s1048
        // Predicated region
        $region65: #{tpu_custom_call.1} parent=43 // pred_check
          %p1050 = pneg %p188
        $region66: #{tpu_custom_call.1} parent=43 // pred_check_branch
          %1052 = sbr.rel (%p1050) target = $region68
        $region67: #{tpu_custom_call.1} parent=43 // pred_region
          %s1054 = ssub.s32 256, 256
          %1055 = vsyncadd %s1046, %s1054
          %s1056 = smul.addr %s29, 4
          %s1057 = sadd.s32 %s30, %s1056
          %s1058 = smul.addr %s1057, 128
          %s1059 = scalar_lea.hbm %s6, %s1058
          %s1060 = sshll.u32 %s1049, 4
          %s1061 = int_to_ptr.vmem [resolvable:$true] %s1060
          %1066 = dma.vmem_to_hbm [thread:$0]  %s1061, 256, %s1059, %s1046, 128, 256, 8
        $region68: #{tpu_custom_call.1} parent=43 // pred_fallthru
          _
      $region44: #{tpu_custom_call.1} parent=5 // pred_fallthru
        _
      %p1067 = scmp.le.s32.totalorder 2, %s20
      // Predicated region
      $region69: #{tpu_custom_call.1} parent=5 // pred_check
        %p1068 = pneg %p1067
      $region70: #{tpu_custom_call.1} parent=5 // pred_check_branch
        %1070 = sbr.rel (%p1068) target = $region72
      $region71: #{tpu_custom_call.1} parent=5 // pred_region
        %s1071 = ssub.s32 %s20, 2
        // Predicated region
        $region73: #{tpu_custom_call.1} parent=71 // pred_check
          %p1072 = pneg %p194
        $region74: #{tpu_custom_call.1} parent=71 // pred_check_branch
          %1074 = sbr.rel (%p1072) target = $region76
        $region75: #{tpu_custom_call.1} parent=71 // pred_region
          %s1075 = sand.u32 %s179, 1
          %s1076 = scalar_lea.sflag [#allocation6], %s1075
          %s1077 = sand.u32 %s179, 1
          %s1078 = smul.addr %s1077, 16
          %s1079 = scalar_lea.vmem [#allocation12], %s1078
          %1080 = dma.done %s1076, 256
        $region76: #{tpu_custom_call.1} parent=71 // pred_fallthru
          _
      $region72: #{tpu_custom_call.1} parent=5 // pred_fallthru
        _
    $region6: #{tpu_custom_call.1} parent=1 // loop_footer
      %s24 = sadd.s32 1, %s20
    $region7: #{tpu_custom_call.1} parent=1 // loop_footer_branch
      %19 = sbr.rel target = $region3
    $region8: #{tpu_custom_call.1} parent=1 // loop_exit
      _
    %1081 = vsyncpa [#allocation5], 1
    %s1082 = scalar_lea.sflag [#allocation5], 1
    %1083 = vsyncpa %s1082, 1
    %1084 = vsyncpa [#allocation8], 1
    %1085 = vsyncpa [#allocation11], 1
    %1086 = vsyncpa [#allocation6], 1
    %s1087 = scalar_lea.sflag [#allocation6], 1
    %1088 = vsyncpa %s1087, 1

</llo_original>
